<compile_context>
chip_gen: v5e
topology: v5e:2x2
jax: 0.10.0
libtpu: 0.0.40
codegen_flags: <defaults>
</compile_context>

<pallas_src>
import jax
import jax.numpy as jnp
from jax.experimental import pallas as pl
from jax.experimental.pallas import tpu as pltpu

# -------------------- problem sizes (small, synthetic "Cora-like") ----------
N_NODES   = 128    # number of graph nodes
F_IN      = 32     # dataset.num_node_features (small synthetic stand-in)
HIDDEN    = 16     # GATConv(., 16)
N_CLS     = 8      # dataset.num_classes (small synthetic stand-in)
NEG_SLOPE = 0.2    # GATConv default LeakyReLU slope

# augmented input widths (trailing ~1 column carried through both layers)
G1 = F_IN + 1      # 33 : layer-1 input width
G2 = HIDDEN + 1    # 17 : layer-2 input width (= layer-1 output width)

# -------------------- packed weight-slab layout (single DMA) ----------------
R_W1    = 0                # rows [0, G1)        cols [0, HIDDEN+2) : W1_full
R_W2    = 40               # rows [40, 40+G2)    cols [0, N_CLS+2)  : W2_full (8-aligned)
R_ASRC1 = R_W2 + G2        # 57 : [a_src1 W1^T | 0]   cols [0, G1)
R_ASRC2 = R_ASRC1 + 1      # 58 : [a_src2 W2^T | 0]   cols [0, G2)
R_B1    = R_ASRC2 + 1      # 59 : [b1 | 0]            cols [0, HIDDEN+1)
R_B2    = R_B1 + 1         # 60 : [b2 | 0]            cols [0, N_CLS+1)
SLAB_ROWS = 64
SLAB_COLS = G1             # 33 (widest row)


def _gat_layer(g, w_full, a_src_fold, bias_aug, adj_mask, fout):
    """Dense single-head GATConv on full VMEM tiles (all f32).

    g          : (N, Fin+1)   layer input with trailing ~1 column
    w_full     : (Fin+1, Fout+2) = [[W, 0, W a_dst^T], [0, 1, 0]]
    a_src_fold : (1, Fin+1)   = [a_src W^T, 0]
    bias_aug   : (1, Fout+1)  = [bias, 0]
    adj_mask   : (N, N) bool  (True where edge j -> i)
    returns    : (N, Fout+1)  = [out | ~1]   (ones column preserved for next layer)
    """
    # one MXU pass gives h, the carried ones column, and the per-destination score
    h_full = jnp.dot(g, w_full, preferred_element_type=jnp.float32)   # (N, Fout+2) = [h|1|d]
    d_col = h_full[:, fout + 1:fout + 2]                              # (N, 1)
    # lane-dense per-source score row: s_row[0, j] = a_src . h_j
    s_row = jax.lax.dot_general(a_src_fold, g, (((1,), (1,)), ((), ())),
                                preferred_element_type=jnp.float32)   # (1, N)
    e = d_col + s_row                                                 # (N, N)
    e = jnp.maximum(e, NEG_SLOPE * e)                                 # LeakyReLU(0.2)
    e = jnp.where(adj_mask, e, -1e30)                                 # per-layer int8 mask
    m = jnp.max(e, axis=1, keepdims=True)
    p = jnp.exp(e - m)                        # masked entries underflow to exactly 0
    # single MXU pass: [sum_j p*h_j | sum_j p]  -> denominator from the MXU,
    # no cross-lane XLU sum on the critical path.
    agg_full = jnp.dot(p, h_full[:, :fout + 1],
                       preferred_element_type=jnp.float32)            # (N, Fout+1)
    denom = agg_full[:, fout:fout + 1]        # > 0: self loops guarantee >= 1 edge/row
    return agg_full * pl.reciprocal(denom, approx=True) + bias_aug


def gat_forward_kernel(x_ref, adj_ref, slab_ref, out_ref):
    g1 = x_ref[...]                              # (N, F_IN+1), ones column appended
    adj_mask = adj_ref[...] != 0                 # packed int8 -> bool, ~4 vregs live

    # unpack the single packed weight slab (static slices of the VMEM ref)
    w1_full = slab_ref[R_W1:R_W1 + G1, 0:HIDDEN + 2]       # (G1, HIDDEN+2)
    w2_full = slab_ref[R_W2:R_W2 + G2, 0:N_CLS + 2]        # (G2, N_CLS+2)
    asrc1_f = slab_ref[R_ASRC1:R_ASRC1 + 1, 0:G1]          # (1, G1)
    asrc2_f = slab_ref[R_ASRC2:R_ASRC2 + 1, 0:G2]          # (1, G2)
    b1_aug  = slab_ref[R_B1:R_B1 + 1, 0:HIDDEN + 1]        # (1, HIDDEN+1)
    b2_aug  = slab_ref[R_B2:R_B2 + 1, 0:N_CLS + 1]         # (1, N_CLS+1)

    # ---- layer 1: GATConv(F_IN, HIDDEN) + relu ----
    g2 = _gat_layer(g1, w1_full, asrc1_f, b1_aug, adj_mask, HIDDEN)   # (N, HIDDEN+1)
    g2 = jnp.maximum(g2, 0.0)                   # relu (ones column stays ~1)
    # TODO(synk): F.dropout implemented as identity (eval-mode semantics).

    # ---- layer 2: GATConv(HIDDEN, N_CLS) ----
    h2 = _gat_layer(g2, w2_full, asrc2_f, b2_aug, adj_mask, N_CLS)    # (N, N_CLS+1)
    h2 = h2[:, :N_CLS]

    # ---- log_softmax over classes (dim=1) ----
    m = jnp.max(h2, axis=1, keepdims=True)
    z = h2 - m
    lse = jnp.log(jnp.sum(jnp.exp(z), axis=1, keepdims=True))
    out_ref[...] = z - lse


def _pack_params(params):
    """Fold attention projections into the weight matmuls and pack everything
    into one padded f32 slab (3 DMAs total for the kernel instead of 8)."""
    (w1, asrc1, adst1, b1, w2, asrc2, adst2, b2) = params

    def fold(w, a_src, a_dst):
        fin, fout = w.shape
        # W_full = [[W, 0, W a_dst^T], [0, 1, 0]]  ->  [x|1] @ W_full = [h | 1 | d]
        top = jnp.concatenate([w, jnp.zeros((fin, 1), jnp.float32), w @ a_dst.T], axis=1)
        bot = jnp.zeros((1, fout + 2), jnp.float32).at[0, fout].set(1.0)
        w_full = jnp.concatenate([top, bot], axis=0)                  # (fin+1, fout+2)
        a_fold = jnp.concatenate([a_src @ w.T, jnp.zeros((1, 1), jnp.float32)], axis=1)
        return w_full, a_fold                                         # (1, fin+1)

    w1_full, asrc1_f = fold(w1, asrc1, adst1)    # (33, 18), (1, 33)
    w2_full, asrc2_f = fold(w2, asrc2, adst2)    # (17, 10), (1, 17)
    b1_aug = jnp.concatenate([b1, jnp.zeros((1, 1), jnp.float32)], axis=1)   # (1, 17)
    b2_aug = jnp.concatenate([b2, jnp.zeros((1, 1), jnp.float32)], axis=1)   # (1, 9)

    slab = jnp.zeros((SLAB_ROWS, SLAB_COLS), jnp.float32)
    slab = slab.at[R_W1:R_W1 + G1, 0:HIDDEN + 2].set(w1_full)
    slab = slab.at[R_W2:R_W2 + G2, 0:N_CLS + 2].set(w2_full)
    slab = slab.at[R_ASRC1, 0:G1].set(asrc1_f[0])
    slab = slab.at[R_ASRC2, 0:G2].set(asrc2_f[0])
    slab = slab.at[R_B1, 0:HIDDEN + 1].set(b1_aug[0])
    slab = slab.at[R_B2, 0:N_CLS + 1].set(b2_aug[0])
    return slab


def gat_forward(x, adj, params):
    """x: (B, N, F_IN) f32, adj: (B, N, N) any numeric (nonzero == edge j->i)."""
    B = x.shape[0]
    slab = _pack_params(params)

    # append the carried ones column (wrapper-side, tiny XLA op)
    x_aug = jnp.concatenate(
        [x.astype(jnp.float32), jnp.ones(x.shape[:-1] + (1,), jnp.float32)], axis=-1)

    # GATConv default add_self_loops=True; also guarantees every softmax row has
    # at least one edge so the denominator is never ~0. int8: 4x less traffic.
    eye = jnp.eye(N_NODES, dtype=jnp.bool_)
    adj_i8 = jnp.logical_or(adj != 0, eye).astype(jnp.int8)

    return pl.pallas_call(
        gat_forward_kernel,
        out_shape=jax.ShapeDtypeStruct((B, N_NODES, N_CLS), jnp.float32),
        grid=(B,),
        in_specs=[
            pl.BlockSpec((None, N_NODES, G1), lambda b: (b, 0, 0)),        # x_aug
            pl.BlockSpec((None, N_NODES, N_NODES), lambda b: (b, 0, 0)),   # adj (int8)
            pl.BlockSpec((SLAB_ROWS, SLAB_COLS), lambda b: (0, 0)),        # weight slab
        ],
        out_specs=pl.BlockSpec((None, N_NODES, N_CLS), lambda b: (b, 0, 0)),
        compiler_params=pltpu.CompilerParams(
            dimension_semantics=("parallel",)),   # shard graphs across v7x's 2 TCs
    )(x_aug, adj_i8, slab)


# -------------------- pure-JAX reference (for sanity check) -----------------
def _ref_layer(h_in, w, a_src, a_dst, bias, adj):
    h = h_in @ w
    d = h @ a_dst[0]
    s = h @ a_src[0]
    e = d[:, None] + s[None, :]
    e = jnp.where(e > 0, e, NEG_SLOPE * e)
    e = jnp.where(adj > 0, e, -1e30)
    p = jax.nn.softmax(e, axis=1)
    p = jnp.where(adj > 0, p, 0.0)
    p = p / jnp.sum(p, axis=1, keepdims=True)
    return p @ h + bias


def gat_forward_ref(x, adj, params):
    (w1, asrc1, adst1, b1, w2, asrc2, adst2, b2) = params

    def one(xg, ag):
        ag = jnp.maximum((ag != 0).astype(jnp.float32), jnp.eye(N_NODES, dtype=jnp.float32))
        h1 = jnp.maximum(_ref_layer(xg, w1, asrc1, adst1, b1, ag), 0.0)
        h2 = _ref_layer(h1, w2, asrc2, adst2, b2, ag)
        return jax.nn.log_softmax(h2, axis=1)

    return jax.vmap(one)(x, adj)


if __name__ == "__main__":
    key = jax.random.PRNGKey(0)
    k_x, k_e, k_w1, k_a1s, k_a1d, k_w2, k_a2s, k_a2d = jax.random.split(key, 8)

    B = 2  # batch of graphs -> "parallel" grid axis (v7x: one graph per TensorCore)

    # node features
    x = jax.random.normal(k_x, (B, N_NODES, F_IN), dtype=jnp.float32)

    # synthetic edge_index -> dense adjacency mask adj[b, dst, src], + self loops
    n_edges = 512
    src = jax.random.randint(k_e, (B, n_edges), 0, N_NODES)
    dst = jax.random.randint(jax.random.fold_in(k_e, 1), (B, n_edges), 0, N_NODES)
    bidx = jnp.broadcast_to(jnp.arange(B)[:, None], (B, n_edges))
    adj = jnp.zeros((B, N_NODES, N_NODES), jnp.float32).at[bidx, dst, src].set(1.0)
    adj = jnp.maximum(adj, jnp.eye(N_NODES, dtype=jnp.float32)[None])  # self loops

    # deterministic Glorot-ish parameter init (GATConv shapes, heads=1)
    def glorot(k, shape):
        fan_in, fan_out = shape[0], shape[-1]
        s = jnp.sqrt(6.0 / (fan_in + fan_out))
        return jax.random.uniform(k, shape, jnp.float32, -s, s)

    w1    = glorot(k_w1, (F_IN, HIDDEN))
    asrc1 = glorot(k_a1s, (1, HIDDEN))
    adst1 = glorot(k_a1d, (1, HIDDEN))
    b1    = jnp.zeros((1, HIDDEN), jnp.float32)
    w2    = glorot(k_w2, (HIDDEN, N_CLS))
    asrc2 = glorot(k_a2s, (1, N_CLS))
    adst2 = glorot(k_a2d, (1, N_CLS))
    b2    = jnp.zeros((1, N_CLS), jnp.float32)

    params = (w1, asrc1, adst1, b1, w2, asrc2, adst2, b2)

    out = gat_forward(x, adj, params)
    out = jax.block_until_ready(out)

    ref = gat_forward_ref(x, adj, params)
    assert out.shape == (B, N_NODES, N_CLS)
    # tolerance covers the EUP approximate reciprocal (attention softmax + carried
    # ~1 column) and the re-associated (folded) attention projections.
    assert jnp.allclose(out, ref, atol=5e-3, rtol=5e-3), "mismatch vs reference"

    print("KERNEL_OK")
</pallas_src>

<mosaic_0001>
module attributes {stable_mosaic.version = 11 : i64} {
  func.func @gat_forward_kernel(%arg0: i32, %arg1: memref<1x128x33xf32, #tpu.memory_space<vmem>>, %arg2: memref<1x128x128xi8, #tpu.memory_space<vmem>>, %arg3: memref<64x33xf32, #tpu.memory_space<vmem>>, %arg4: memref<1x128x8xf32, #tpu.memory_space<vmem>>) attributes {dimension_semantics = [#tpu.dimension_semantics<parallel>], iteration_bounds = array<i64: 2>, scalar_prefetch = 0 : i64, scratch_operands = 0 : i64, tpu.core_type = #tpu.core_type<tc>, window_params = [{transform_indices = @transform_0, window_bounds = array<i64: 1, 128, 33>}, {transform_indices = @transform_1, window_bounds = array<i64: 1, 128, 128>}, {pipeline_mode = #tpu.pipeline_mode<synchronous>, transform_indices = @transform_2, window_bounds = array<i64: 64, 33>}, {transform_indices = @transform_3, window_bounds = array<i64: 1, 128, 8>}]} {
    %c0 = arith.constant 0 : index
    %c0_0 = arith.constant 0 : index
    %c0_1 = arith.constant 0 : index
    %0 = vector.load %arg1[%c0, %c0_0, %c0_1] : memref<1x128x33xf32, #tpu.memory_space<vmem>>, vector<1x128x33xf32>
    %1 = vector.shape_cast %0 : vector<1x128x33xf32> to vector<128x33xf32>
    %c0_2 = arith.constant 0 : index
    %c0_3 = arith.constant 0 : index
    %c0_4 = arith.constant 0 : index
    %2 = vector.load %arg2[%c0_2, %c0_3, %c0_4] : memref<1x128x128xi8, #tpu.memory_space<vmem>>, vector<1x128x128xi8>
    %3 = vector.shape_cast %2 : vector<1x128x128xi8> to vector<128x128xi8>
    %c0_i8 = arith.constant 0 : i8
    %4 = vector.broadcast %c0_i8 : i8 to vector<128x128xi8>
    %5 = arith.cmpi ne, %3, %4 : vector<128x128xi8>
    %c0_5 = arith.constant 0 : index
    %c0_6 = arith.constant 0 : index
    %6 = vector.load %arg3[%c0_5, %c0_6] : memref<64x33xf32, #tpu.memory_space<vmem>>, vector<33x18xf32>
    %c40 = arith.constant 40 : index
    %c0_7 = arith.constant 0 : index
    %7 = vector.load %arg3[%c40, %c0_7] : memref<64x33xf32, #tpu.memory_space<vmem>>, vector<17x10xf32>
    %c57 = arith.constant 57 : index
    %c0_8 = arith.constant 0 : index
    %8 = vector.load %arg3[%c57, %c0_8] : memref<64x33xf32, #tpu.memory_space<vmem>>, vector<1x33xf32>
    %c58 = arith.constant 58 : index
    %c0_9 = arith.constant 0 : index
    %9 = vector.load %arg3[%c58, %c0_9] : memref<64x33xf32, #tpu.memory_space<vmem>>, vector<1x17xf32>
    %c59 = arith.constant 59 : index
    %c0_10 = arith.constant 0 : index
    %10 = vector.load %arg3[%c59, %c0_10] : memref<64x33xf32, #tpu.memory_space<vmem>>, vector<1x17xf32>
    %c60 = arith.constant 60 : index
    %c0_11 = arith.constant 0 : index
    %11 = vector.load %arg3[%c60, %c0_11] : memref<64x33xf32, #tpu.memory_space<vmem>>, vector<1x9xf32>
    %cst = arith.constant dense<0.000000e+00> : vector<128x18xf32>
    %12 = tpu.matmul %1, %6, %cst {dimension_numbers = #tpu.dot_dimension_numbers<[1], [0], [0], [1], [0, 0, 1, 1], [], []>} : vector<128x33xf32>, vector<33x18xf32>, vector<128x18xf32> -> vector<128x18xf32>
    %13 = vector.extract_strided_slice %12 {offsets = [0, 17], sizes = [128, 1], strides = [1, 1]} : vector<128x18xf32> to vector<128x1xf32>
    %cst_12 = arith.constant dense<0.000000e+00> : vector<1x128xf32>
    %14 = tpu.matmul %8, %1, %cst_12 {dimension_numbers = #tpu.dot_dimension_numbers<[1], [1], [0], [0], [0, 0, 1, 0], [], []>} : vector<1x33xf32>, vector<128x33xf32>, vector<1x128xf32> -> vector<1x128xf32>
    %15 = vector.broadcast %13 : vector<128x1xf32> to vector<128x128xf32>
    %16 = vector.broadcast %14 : vector<1x128xf32> to vector<128x128xf32>
    %17 = arith.addf %15, %16 : vector<128x128xf32>
    %cst_13 = arith.constant 2.000000e-01 : f32
    %18 = vector.broadcast %cst_13 : f32 to vector<128x128xf32>
    %19 = arith.mulf %18, %17 : vector<128x128xf32>
    %20 = arith.maximumf %17, %19 : vector<128x128xf32>
    %cst_14 = arith.constant -1.000000e+30 : f32
    %21 = vector.broadcast %cst_14 : f32 to vector<128x128xf32>
    %22 = arith.select %5, %20, %21 : vector<128x128xi1>, vector<128x128xf32>
    %cst_15 = arith.constant dense<0xFF800000> : vector<128xf32>
    %23 = vector.multi_reduction <maximumf>, %22, %cst_15 [1] : vector<128x128xf32> to vector<128xf32>
    %24 = vector.shape_cast %23 : vector<128xf32> to vector<128x1xf32>
    %25 = vector.broadcast %24 : vector<128x1xf32> to vector<128x128xf32>
    %26 = arith.subf %22, %25 : vector<128x128xf32>
    %27 = math.exp %26 : vector<128x128xf32>
    %28 = vector.extract_strided_slice %12 {offsets = [0, 0], sizes = [128, 17], strides = [1, 1]} : vector<128x18xf32> to vector<128x17xf32>
    %cst_16 = arith.constant dense<0.000000e+00> : vector<128x17xf32>
    %29 = tpu.matmul %27, %28, %cst_16 {dimension_numbers = #tpu.dot_dimension_numbers<[1], [0], [0], [1], [0, 0, 1, 1], [], []>} : vector<128x128xf32>, vector<128x17xf32>, vector<128x17xf32> -> vector<128x17xf32>
    %30 = vector.extract_strided_slice %29 {offsets = [0, 16], sizes = [128, 1], strides = [1, 1]} : vector<128x17xf32> to vector<128x1xf32>
    %31 = tpu.reciprocal %30 {approx = true} : vector<128x1xf32> -> vector<128x1xf32>
    %32 = vector.broadcast %31 : vector<128x1xf32> to vector<128x17xf32>
    %33 = arith.mulf %29, %32 : vector<128x17xf32>
    %34 = vector.broadcast %10 : vector<1x17xf32> to vector<128x17xf32>
    %35 = arith.addf %33, %34 : vector<128x17xf32>
    %cst_17 = arith.constant 0.000000e+00 : f32
    %36 = vector.broadcast %cst_17 : f32 to vector<128x17xf32>
    %37 = arith.maximumf %35, %36 : vector<128x17xf32>
    %cst_18 = arith.constant dense<0.000000e+00> : vector<128x10xf32>
    %38 = tpu.matmul %37, %7, %cst_18 {dimension_numbers = #tpu.dot_dimension_numbers<[1], [0], [0], [1], [0, 0, 1, 1], [], []>} : vector<128x17xf32>, vector<17x10xf32>, vector<128x10xf32> -> vector<128x10xf32>
    %39 = vector.extract_strided_slice %38 {offsets = [0, 9], sizes = [128, 1], strides = [1, 1]} : vector<128x10xf32> to vector<128x1xf32>
    %cst_19 = arith.constant dense<0.000000e+00> : vector<1x128xf32>
    %40 = tpu.matmul %9, %37, %cst_19 {dimension_numbers = #tpu.dot_dimension_numbers<[1], [1], [0], [0], [0, 0, 1, 0], [], []>} : vector<1x17xf32>, vector<128x17xf32>, vector<1x128xf32> -> vector<1x128xf32>
    %41 = vector.broadcast %39 : vector<128x1xf32> to vector<128x128xf32>
    %42 = vector.broadcast %40 : vector<1x128xf32> to vector<128x128xf32>
    %43 = arith.addf %41, %42 : vector<128x128xf32>
    %cst_20 = arith.constant 2.000000e-01 : f32
    %44 = vector.broadcast %cst_20 : f32 to vector<128x128xf32>
    %45 = arith.mulf %44, %43 : vector<128x128xf32>
    %46 = arith.maximumf %43, %45 : vector<128x128xf32>
    %cst_21 = arith.constant -1.000000e+30 : f32
    %47 = vector.broadcast %cst_21 : f32 to vector<128x128xf32>
    %48 = arith.select %5, %46, %47 : vector<128x128xi1>, vector<128x128xf32>
    %cst_22 = arith.constant dense<0xFF800000> : vector<128xf32>
    %49 = vector.multi_reduction <maximumf>, %48, %cst_22 [1] : vector<128x128xf32> to vector<128xf32>
    %50 = vector.shape_cast %49 : vector<128xf32> to vector<128x1xf32>
    %51 = vector.broadcast %50 : vector<128x1xf32> to vector<128x128xf32>
    %52 = arith.subf %48, %51 : vector<128x128xf32>
    %53 = math.exp %52 : vector<128x128xf32>
    %54 = vector.extract_strided_slice %38 {offsets = [0, 0], sizes = [128, 9], strides = [1, 1]} : vector<128x10xf32> to vector<128x9xf32>
    %cst_23 = arith.constant dense<0.000000e+00> : vector<128x9xf32>
    %55 = tpu.matmul %53, %54, %cst_23 {dimension_numbers = #tpu.dot_dimension_numbers<[1], [0], [0], [1], [0, 0, 1, 1], [], []>} : vector<128x128xf32>, vector<128x9xf32>, vector<128x9xf32> -> vector<128x9xf32>
    %56 = vector.extract_strided_slice %55 {offsets = [0, 8], sizes = [128, 1], strides = [1, 1]} : vector<128x9xf32> to vector<128x1xf32>
    %57 = tpu.reciprocal %56 {approx = true} : vector<128x1xf32> -> vector<128x1xf32>
    %58 = vector.broadcast %57 : vector<128x1xf32> to vector<128x9xf32>
    %59 = arith.mulf %55, %58 : vector<128x9xf32>
    %60 = vector.broadcast %11 : vector<1x9xf32> to vector<128x9xf32>
    %61 = arith.addf %59, %60 : vector<128x9xf32>
    %62 = vector.extract_strided_slice %61 {offsets = [0, 0], sizes = [128, 8], strides = [1, 1]} : vector<128x9xf32> to vector<128x8xf32>
    %cst_24 = arith.constant dense<0xFF800000> : vector<128xf32>
    %63 = vector.multi_reduction <maximumf>, %62, %cst_24 [1] : vector<128x8xf32> to vector<128xf32>
    %64 = vector.shape_cast %63 : vector<128xf32> to vector<128x1xf32>
    %65 = vector.broadcast %64 : vector<128x1xf32> to vector<128x8xf32>
    %66 = arith.subf %62, %65 : vector<128x8xf32>
    %67 = math.exp %66 : vector<128x8xf32>
    %cst_25 = arith.constant dense<0.000000e+00> : vector<128xf32>
    %68 = vector.multi_reduction <add>, %67, %cst_25 [1] : vector<128x8xf32> to vector<128xf32>
    %69 = vector.shape_cast %68 : vector<128xf32> to vector<128x1xf32>
    %70 = math.log %69 : vector<128x1xf32>
    %71 = vector.broadcast %70 : vector<128x1xf32> to vector<128x8xf32>
    %72 = arith.subf %66, %71 : vector<128x8xf32>
    %c0_26 = arith.constant 0 : index
    %c0_27 = arith.constant 0 : index
    %c0_28 = arith.constant 0 : index
    %73 = vector.load %arg4[%c0_26, %c0_27, %c0_28] : memref<1x128x8xf32, #tpu.memory_space<vmem>>, vector<1x128x8xf32>
    %74 = vector.shape_cast %73 : vector<1x128x8xf32> to vector<128x8xf32>
    %75 = vector.shape_cast %72 : vector<128x8xf32> to vector<1x128x8xf32>
    tpu.vector_store %arg4[%c0_26, %c0_27, %c0_28], %75 {strides = array<i32>} : memref<1x128x8xf32, #tpu.memory_space<vmem>>, vector<1x128x8xf32>,
    return
  }
  func.func @transform_0(%arg0: i32) -> (i32, i32, i32) {
    %c0_i32 = arith.constant 0 : i32
    %c0_i32_0 = arith.constant 0 : i32
    %c0_i32_1 = arith.constant 0 : i32
    return %arg0, %c0_i32, %c0_i32_0 : i32, i32, i32
  }
  func.func @transform_1(%arg0: i32) -> (i32, i32, i32) {
    %c0_i32 = arith.constant 0 : i32
    %c0_i32_0 = arith.constant 0 : i32
    %c0_i32_1 = arith.constant 0 : i32
    return %arg0, %c0_i32, %c0_i32_0 : i32, i32, i32
  }
  func.func @transform_2(%arg0: i32) -> (i32, i32) {
    %c0_i32 = arith.constant 0 : i32
    %c0_i32_0 = arith.constant 0 : i32
    %c0_i32_1 = arith.constant 0 : i32
    return %c0_i32, %c0_i32_0 : i32, i32
  }
  func.func @transform_3(%arg0: i32) -> (i32, i32, i32) {
    %c0_i32 = arith.constant 0 : i32
    %c0_i32_0 = arith.constant 0 : i32
    %c0_i32_1 = arith.constant 0 : i32
    return %arg0, %c0_i32, %c0_i32_0 : i32, i32, i32
  }
}

</mosaic_0001>

<llo_original>
// kernel: tpu_custom_call.1
$region0: #{tpu_custom_call.1}
  #allocation0 [shape = 'u32[]', space=smem, size = 0x4, offset = 0x4, fixed_abs, tag = 'smem constant byte address 0x4 - core index']
  #allocation1 [shape = 'u32[72,128]{1,0:T(1,128)}', space=vmem, size = 0x9000, scoped, tag = 'internal scratch']
  %s0 = inlined_call_operand.vmem [shape: f32[2,128,33], index: 0, kind: input, shape index: {}]
  %s1 = inlined_call_operand.vmem [shape: s8[2,128,128], index: 1, kind: input, shape index: {}]
  %s2 = inlined_call_operand.vmem [shape: f32[64,33], index: 2, kind: input, shape index: {}]
  %s3 = inlined_call_operand.vmem [shape: f32[2,128,8], index: 3, kind: output, shape index: {}]
  %s4 = sld [smem:[#allocation0]]
  $region45: #{tpu_custom_call.1} parent=0
    _
  %s6 = ssub.s32 1, %s4
  %s7 = scalar_select 0, %s6, %s4
  loop: start=0, step=1, limit=4
  $region2: #{tpu_custom_call.1} parent=0 // loop_pre_header
    _
  $region3: #{tpu_custom_call.1} parent=0 // loop_header
    %s9 = sphi 0, %s13
    %p10 = scmp.ge.s32.totalorder %s9, 4
    %s19 = sphi 0, %s21
    %s22 = sphi 0, %s19
    %s23 = sphi 0, %s22
    %s39 = sphi 0, %s23
    %s45 = sphi 0, %s47
    %s48 = sphi 0, %s45
    %s49 = sphi 0, %s48
    %s65 = sphi 0, %s49
    %s69 = sphi 0, %s69
    %s71 = sphi 0, %s69
    %s72 = sphi 0, %s71
    %s86 = sphi 0, %s72
    %s92 = sphi 0, %s94
    %s95 = sphi 0, %s92
    %s96 = sphi 0, %s95
    %s112 = sphi 0, %s96
  $region4: #{tpu_custom_call.1} parent=0 // loop_header_branch
    %12 = sbr.rel (%p10) target = $region8
  $region5: #{tpu_custom_call.1} parent=0 // loop_body
    %s14 = ssub.s32 %s9, 1
    %s15 = ssub.s32 %s9, 2
    %s16 = sadd.s32 %s9, 1
    %s17 = ssub.s32 %s9, %s16
    %p18 = scmp.eq.s32.totalorder %s17, 0
    %s20 = sadd.s32 %s19, 1
    %s21 = scalar_select %p18, %s19, %s20
    %p24 = pneg %p18
    %p25 = scmp.eq.s32.totalorder %s9, 1
    %p26 = por %p24, %p25
    %p27 = scmp.ne.s32.totalorder %s19, %s22
    %p28 = scmp.eq.s32.totalorder %s9, 0
    %p29 = por %p27, %p28
    %p30 = scmp.ne.s32.totalorder %s19, %s22
    %p31 = scmp.eq.s32.totalorder %s14, 1
    %p32 = por %p30, %p31
    %p33 = scmp.ne.s32.totalorder %s22, %s23
    %p34 = scmp.eq.s32.totalorder %s14, 0
    %p35 = por %p33, %p34
    %p36 = scmp.ne.s32.totalorder %s22, %s23
    %p37 = scmp.eq.s32.totalorder %s15, 1
    %p38 = por %p36, %p37
    %p40 = scmp.ne.s32.totalorder %s23, %s39
    %p41 = scmp.eq.s32.totalorder %s15, 0
    %p42 = por %p40, %p41
    %s43 = ssub.s32 %s9, %s16
    %p44 = scmp.eq.s32.totalorder %s43, 0
    %s46 = sadd.s32 %s45, 1
    %s47 = scalar_select %p44, %s45, %s46
    %p50 = pneg %p44
    %p51 = scmp.eq.s32.totalorder %s9, 1
    %p52 = por %p50, %p51
    %p53 = scmp.ne.s32.totalorder %s45, %s48
    %p54 = scmp.eq.s32.totalorder %s9, 0
    %p55 = por %p53, %p54
    %p56 = scmp.ne.s32.totalorder %s45, %s48
    %p57 = scmp.eq.s32.totalorder %s14, 1
    %p58 = por %p56, %p57
    %p59 = scmp.ne.s32.totalorder %s48, %s49
    %p60 = scmp.eq.s32.totalorder %s14, 0
    %p61 = por %p59, %p60
    %p62 = scmp.ne.s32.totalorder %s48, %s49
    %p63 = scmp.eq.s32.totalorder %s15, 1
    %p64 = por %p62, %p63
    %p66 = scmp.ne.s32.totalorder %s49, %s65
    %p67 = scmp.eq.s32.totalorder %s15, 0
    %p68 = por %p66, %p67
    %s70 = sadd.s32 %s69, 1
    %p73 = scmp.eq.s32.totalorder %s9, 1
    %p74 = scmp.ne.s32.totalorder %s69, %s71
    %p75 = scmp.eq.s32.totalorder %s9, 0
    %p76 = por %p74, %p75
    %p77 = scmp.ne.s32.totalorder %s69, %s71
    %p78 = scmp.eq.s32.totalorder %s14, 1
    %p79 = por %p77, %p78
    %p80 = scmp.ne.s32.totalorder %s71, %s72
    %p81 = scmp.eq.s32.totalorder %s14, 0
    %p82 = por %p80, %p81
    %p83 = scmp.ne.s32.totalorder %s71, %s72
    %p84 = scmp.eq.s32.totalorder %s15, 1
    %p85 = por %p83, %p84
    %p87 = scmp.ne.s32.totalorder %s72, %s86
    %p88 = scmp.eq.s32.totalorder %s15, 0
    %p89 = por %p87, %p88
    %s90 = ssub.s32 %s9, %s16
    %p91 = scmp.eq.s32.totalorder %s90, 0
    %s93 = sadd.s32 %s92, 1
    %s94 = scalar_select %p91, %s92, %s93
    %p97 = pneg %p91
    %p98 = scmp.eq.s32.totalorder %s9, 1
    %p99 = por %p97, %p98
    %p100 = scmp.ne.s32.totalorder %s92, %s95
    %p101 = scmp.eq.s32.totalorder %s9, 0
    %p102 = por %p100, %p101
    %p103 = scmp.ne.s32.totalorder %s92, %s95
    %p104 = scmp.eq.s32.totalorder %s14, 1
    %p105 = por %p103, %p104
    %p106 = scmp.ne.s32.totalorder %s95, %s96
    %p107 = scmp.eq.s32.totalorder %s14, 0
    %p108 = por %p106, %p107
    %p109 = scmp.ne.s32.totalorder %s95, %s96
    %p110 = scmp.eq.s32.totalorder %s15, 1
    %p111 = por %p109, %p110
    %p113 = scmp.ne.s32.totalorder %s96, %s112
    %p114 = scmp.eq.s32.totalorder %s15, 0
    %p115 = por %p113, %p114
    %p116 = scmp.le.s32.totalorder 1, %s9
    %p117 = scmp.lt.s32.totalorder %s9, 3
    %p118 = pnand %p116, %p117
    %p119 = pneg %p118
    // Predicated region
    $region9: #{tpu_custom_call.1} parent=5 // pred_check
      _
    $region10: #{tpu_custom_call.1} parent=5 // pred_check_branch
      %121 = sbr.rel (%p118) target = $region12
    $region11: #{tpu_custom_call.1} parent=5 // pred_region
      %s122 = ssub.s32 %s9, 1
      // Predicated region
      $region13: #{tpu_custom_call.1} parent=11 // pred_check
        %p123 = pneg %p82
      $region14: #{tpu_custom_call.1} parent=11 // pred_check_branch
        %125 = sbr.rel (%p123) target = $region16
      $region15: #{tpu_custom_call.1} parent=11 // pred_region
        _
      $region16: #{tpu_custom_call.1} parent=11 // pred_fallthru
        _
    $region12: #{tpu_custom_call.1} parent=5 // pred_fallthru
      _
    %p126 = scmp.lt.s32.totalorder %s9, 2
    // Predicated region
    $region17: #{tpu_custom_call.1} parent=5 // pred_check
      %p127 = pneg %p126
    $region18: #{tpu_custom_call.1} parent=5 // pred_check_branch
      %129 = sbr.rel (%p127) target = $region20
    $region19: #{tpu_custom_call.1} parent=5 // pred_region
      // Predicated region
      $region21: #{tpu_custom_call.1} parent=19 // pred_check
        %p130 = pneg %p29
      $region22: #{tpu_custom_call.1} parent=19 // pred_check_branch
        %132 = sbr.rel (%p130) target = $region24
      $region23: #{tpu_custom_call.1} parent=19 // pred_region
        %p133 = scmp.lt.s32.totalorder %s9, 1
        %s134 = scalar_select %p133, %s9, 1
        %s135 = smul.addr %s134, 16
        %s136 = smul.addr %s135, 8
        %s137 = scalar_lea.vmem %s0, %s136
      $region24: #{tpu_custom_call.1} parent=19 // pred_fallthru
        _
      // Predicated region
      $region25: #{tpu_custom_call.1} parent=19 // pred_check
        %p138 = pneg %p55
      $region26: #{tpu_custom_call.1} parent=19 // pred_check_branch
        %140 = sbr.rel (%p138) target = $region28
      $region27: #{tpu_custom_call.1} parent=19 // pred_region
        %p141 = scmp.lt.s32.totalorder %s9, 1
        %s142 = scalar_select %p141, %s9, 1
        %s143 = smul.addr %s142, 4
        %s144 = smul.addr %s143, 8
        %s145 = scalar_lea.vmem %s1, %s144
      $region28: #{tpu_custom_call.1} parent=19 // pred_fallthru
        _
    $region20: #{tpu_custom_call.1} parent=5 // pred_fallthru
      _
    %p146 = scmp.le.s32.totalorder 1, %s9
    %p147 = scmp.lt.s32.totalorder %s9, 3
    %p148 = pnand %p146, %p147
    %p149 = pneg %p148
    // Predicated region
    $region29: #{tpu_custom_call.1} parent=5 // pred_check
      _
    $region30: #{tpu_custom_call.1} parent=5 // pred_check_branch
      %151 = sbr.rel (%p148) target = $region32
    $region31: #{tpu_custom_call.1} parent=5 // pred_region
      %s152 = ssub.s32 %s9, 1
      %p153 = scmp.lt.s32.totalorder %s14, 1
      %s154 = scalar_select %p153, %s14, 1
      %s155 = smul.addr %s154, 16
      %s156 = smul.addr %s155, 8
      %s157 = scalar_lea.vmem %s0, %s156
      %p158 = pneg %p35
      %p159 = pneg %p32
      %p160 = scmp.lt.s32.totalorder %s14, 1
      %s161 = scalar_select %p160, %s14, 1
      %s162 = smul.addr %s161, 4
      %s163 = smul.addr %s162, 8
      %s164 = scalar_lea.vmem %s1, %s163
      %p165 = pneg %p61
      %p166 = pneg %p58
      %p167 = pneg %p82
      %p168 = pneg %p79
      %p169 = pneg %p108
      %p170 = pneg %p105
      %p171 = scmp.lt.s32.totalorder %s14, 1
      %s172 = scalar_select %p171, %s14, 1
      %s173 = smul.addr %s172, 16
      %s174 = smul.addr %s173, 8
      %s175 = scalar_lea.vmem %s3, %s174
      %p176 = scmp.lt.s32.totalorder %s14, 1
      %s177 = scalar_select %p176, %s14, 1
      %s178 = smul.addr %s177, 16
      %s179 = smul.addr %s178, 8
      %s180 = scalar_lea.vmem %s0, %s179
      %p181 = scmp.lt.s32.totalorder %s14, 1
      %s182 = scalar_select %p181, %s14, 1
      %s183 = smul.addr %s182, 4
      %s184 = smul.addr %s183, 8
      %s185 = scalar_lea.vmem %s1, %s184
      %p186 = scmp.lt.s32.totalorder %s14, 1
      %s187 = scalar_select %p186, %s14, 1
      %s188 = smul.addr %s187, 16
      %s189 = smul.addr %s188, 8
      %s190 = scalar_lea.vmem %s3, %s189
      %v193 = vld [vmem:[%s180] sm:$0xff]
      %v194 = vld [vmem:[%s180 + $0x8] sm:$0xff]
      %v195 = vld [vmem:[%s180 + $0x10] sm:$0xff]
      %v196 = vld [vmem:[%s180 + $0x18] sm:$0xff]
      %v197 = vld [vmem:[%s180 + $0x20] sm:$0xff]
      %v198 = vld [vmem:[%s180 + $0x28] sm:$0xff]
      %v199 = vld [vmem:[%s180 + $0x30] sm:$0xff]
      %v200 = vld [vmem:[%s180 + $0x38] sm:$0xff]
      %v201 = vld [vmem:[%s180 + $0x40] sm:$0xff]
      %v202 = vld [vmem:[%s180 + $0x48] sm:$0xff]
      %v203 = vld [vmem:[%s180 + $0x50] sm:$0xff]
      %v204 = vld [vmem:[%s180 + $0x58] sm:$0xff]
      %v205 = vld [vmem:[%s180 + $0x60] sm:$0xff]
      %v206 = vld [vmem:[%s180 + $0x68] sm:$0xff]
      %v207 = vld [vmem:[%s180 + $0x70] sm:$0xff]
      %v208 = vld [vmem:[%s180 + $0x78] sm:$0xff]
      %v209 = vld [vmem:[%s185] sm:$0xff]
      %v210 = vld [vmem:[%s185 + $0x8] sm:$0xff]
      %v211 = vld [vmem:[%s185 + $0x10] sm:$0xff]
      %v212 = vld [vmem:[%s185 + $0x18] sm:$0xff]
      %vm213 = vnez %v209
      %vm214 = vnez %v210
      %vm215 = vnez %v211
      %vm216 = vnez %v212
      %v217 = vld [vmem:[%s2] sm:$0xff]
      %v218 = vld [vmem:[%s2 + $0x8] sm:$0xff]
      %v219 = vld [vmem:[%s2 + $0x10] sm:$0xff]
      %v220 = vld [vmem:[%s2 + $0x18] sm:$0xff]
      %v221 = vld [vmem:[%s2 + $0x20] sm:$0x1]
      %v222 = vld [vmem:[%s2 + $0x28] sm:$0xff]
      %v223 = vld [vmem:[%s2 + $0x30] sm:$0xff]
      %v224 = vld [vmem:[%s2 + $0x38] sm:$0x1]
      %v225 = vld [vmem:[%s2 + $0x39] sm:$0x1]
      %v226 = vld [vmem:[%s2 + $0x3a] sm:$0x1]
      %v227 = vld [vmem:[%s2 + $0x3b] sm:$0x1]
      %v228 = vld [vmem:[%s2 + $0x3c] sm:$0x1]
      %vm229 = vcmask 269312
      %v231 = vsel %vm229, %v193, 0
      %v234 = vsel %vm229, %v194, 0
      %v237 = vsel %vm229, %v195, 0
      %v240 = vsel %vm229, %v196, 0
      %v243 = vsel %vm229, %v197, 0
      %v246 = vsel %vm229, %v198, 0
      %v249 = vsel %vm229, %v199, 0
      %v252 = vsel %vm229, %v200, 0
      %v255 = vsel %vm229, %v201, 0
      %v258 = vsel %vm229, %v202, 0
      %v261 = vsel %vm229, %v203, 0
      %v264 = vsel %vm229, %v204, 0
      %v267 = vsel %vm229, %v205, 0
      %v270 = vsel %vm229, %v206, 0
      %v273 = vsel %vm229, %v207, 0
      %v276 = vsel %vm229, %v208, 0
      %vm278 = vcmask 1040384
      %v280 = vsel %vm278, %v221, 0
      %282 = vmatpush.msra.mxu0 0.0
      %283 = vmatpush.msra.mxu0 0.0
      %284 = vmatpush.msra.mxu0 0.0
      %285 = vmatpush.msra.mxu0 0.0
      %286 = vmatpush.msra.mxu0 0.0
      %287 = vmatpush.msra.mxu0 0.0
      %288 = vmatpush.msra.mxu0 0.0
      %289 = vmatpush.msra.mxu0 0.0
      %290 = vmatpush.msra.mxu0 0.0
      %291 = vmatpush.msra.mxu0 0.0
      %292 = vmatpush.msra.mxu0 0.0
      %293 = vmatpush.msra.mxu0 %v280
      %294 = vmatpush.msra.mxu0 %v220
      %295 = vmatpush.msra.mxu0 %v219
      %296 = vmatpush.msra.mxu0 %v218
      %297 = vmatpush.msra.mxu0 %v217
      %298 = vmatmul.f32.gmra.mxu0 %v231
      %v299 = vpop.f32.mrf.mxu0
      %v300 = vadd.f32 0.0, %v299
      %301 = vmatmul.f32.gmra.mxu0 %v234
      %v302 = vpop.f32.mrf.mxu0
      %v303 = vadd.f32 0.0, %v302
      %304 = vmatmul.f32.gmra.mxu0 %v237
      %v305 = vpop.f32.mrf.mxu0
      %v306 = vadd.f32 0.0, %v305
      %307 = vmatmul.f32.gmra.mxu0 %v240
      %v308 = vpop.f32.mrf.mxu0
      %v309 = vadd.f32 0.0, %v308
      %310 = vmatmul.f32.gmra.mxu0 %v243
      %v311 = vpop.f32.mrf.mxu0
      %v312 = vadd.f32 0.0, %v311
      %313 = vmatmul.f32.gmra.mxu0 %v246
      %v314 = vpop.f32.mrf.mxu0
      %v315 = vadd.f32 0.0, %v314
      %316 = vmatmul.f32.gmra.mxu0 %v249
      %v317 = vpop.f32.mrf.mxu0
      %v318 = vadd.f32 0.0, %v317
      %319 = vmatmul.f32.gmra.mxu0 %v252
      %v320 = vpop.f32.mrf.mxu0
      %v321 = vadd.f32 0.0, %v320
      %322 = vmatmul.f32.gmra.mxu0 %v255
      %v323 = vpop.f32.mrf.mxu0
      %v324 = vadd.f32 0.0, %v323
      %325 = vmatmul.f32.gmra.mxu0 %v258
      %v326 = vpop.f32.mrf.mxu0
      %v327 = vadd.f32 0.0, %v326
      %328 = vmatmul.f32.gmra.mxu0 %v261
      %v329 = vpop.f32.mrf.mxu0
      %v330 = vadd.f32 0.0, %v329
      %331 = vmatmul.f32.gmra.mxu0 %v264
      %v332 = vpop.f32.mrf.mxu0
      %v333 = vadd.f32 0.0, %v332
      %334 = vmatmul.f32.gmra.mxu0 %v267
      %v335 = vpop.f32.mrf.mxu0
      %v336 = vadd.f32 0.0, %v335
      %337 = vmatmul.f32.gmra.mxu0 %v270
      %v338 = vpop.f32.mrf.mxu0
      %v339 = vadd.f32 0.0, %v338
      %340 = vmatmul.f32.gmra.mxu0 %v273
      %v341 = vpop.f32.mrf.mxu0
      %v342 = vadd.f32 0.0, %v341
      %343 = vmatmul.f32.gmra.mxu0 %v276
      %v344 = vpop.f32.mrf.mxu0
      %v345 = vadd.f32 0.0, %v344
      %346 = vdwg.mxu0
      %v348 = vsel %vm229, %v225, 0
      %350 = vmatpush.xpose.msra.mxu0 %v276
      %351 = vmatpush.xpose.msra.mxu0 %v273
      %352 = vmatpush.xpose.msra.mxu0 %v270
      %353 = vmatpush.xpose.msra.mxu0 %v267
      %354 = vmatpush.xpose.msra.mxu0 %v264
      %355 = vmatpush.xpose.msra.mxu0 %v261
      %356 = vmatpush.xpose.msra.mxu0 %v258
      %357 = vmatpush.xpose.msra.mxu0 %v255
      %358 = vmatpush.xpose.msra.mxu0 %v252
      %359 = vmatpush.xpose.msra.mxu0 %v249
      %360 = vmatpush.xpose.msra.mxu0 %v246
      %361 = vmatpush.xpose.msra.mxu0 %v243
      %362 = vmatpush.xpose.msra.mxu0 %v240
      %363 = vmatpush.xpose.msra.mxu0 %v237
      %364 = vmatpush.xpose.msra.mxu0 %v234
      %365 = vmatpush.xpose.msra.mxu0 %v231
      %366 = vmatmul.f32.gmra.mxu0 %v348
      %v367 = vpop.f32.mrf.mxu0
      %v368 = vadd.f32 0.0, %v367
      %369 = vdwg.mxu0
      %371 = vset.pattern.permute.xlu0 17
      %372 = vperm.xlu0 %371, %v300
      %v373 = vpop.permute.xlu0 %372
      %376 = vset.pattern.permute.xlu0 17
      %377 = vperm.xlu0 %376, %v303
      %v378 = vpop.permute.xlu0 %377
      %381 = vset.pattern.permute.xlu0 17
      %382 = vperm.xlu0 %381, %v306
      %v383 = vpop.permute.xlu0 %382
      %386 = vset.pattern.permute.xlu0 17
      %387 = vperm.xlu0 %386, %v309
      %v388 = vpop.permute.xlu0 %387
      %391 = vset.pattern.permute.xlu0 17
      %392 = vperm.xlu0 %391, %v312
      %v393 = vpop.permute.xlu0 %392
      %396 = vset.pattern.permute.xlu0 17
      %397 = vperm.xlu0 %396, %v315
      %v398 = vpop.permute.xlu0 %397
      %401 = vset.pattern.permute.xlu0 17
      %402 = vperm.xlu0 %401, %v318
      %v403 = vpop.permute.xlu0 %402
      %406 = vset.pattern.permute.xlu0 17
      %407 = vperm.xlu0 %406, %v321
      %v408 = vpop.permute.xlu0 %407
      %411 = vset.pattern.permute.xlu0 17
      %412 = vperm.xlu0 %411, %v324
      %v413 = vpop.permute.xlu0 %412
      %416 = vset.pattern.permute.xlu0 17
      %417 = vperm.xlu0 %416, %v327
      %v418 = vpop.permute.xlu0 %417
      %421 = vset.pattern.permute.xlu0 17
      %422 = vperm.xlu0 %421, %v330
      %v423 = vpop.permute.xlu0 %422
      %426 = vset.pattern.permute.xlu0 17
      %427 = vperm.xlu0 %426, %v333
      %v428 = vpop.permute.xlu0 %427
      %431 = vset.pattern.permute.xlu0 17
      %432 = vperm.xlu0 %431, %v336
      %v433 = vpop.permute.xlu0 %432
      %436 = vset.pattern.permute.xlu0 17
      %437 = vperm.xlu0 %436, %v339
      %v438 = vpop.permute.xlu0 %437
      %441 = vset.pattern.permute.xlu0 17
      %442 = vperm.xlu0 %441, %v342
      %v443 = vpop.permute.xlu0 %442
      %446 = vset.pattern.permute.xlu0 17
      %447 = vperm.xlu0 %446, %v345
      %v448 = vpop.permute.xlu0 %447
      %v450 = vperm.slane %v368, 0
      %v451 = vadd.f32 %v373, %v450
      %v452 = vadd.f32 %v378, %v450
      %v453 = vadd.f32 %v383, %v450
      %v454 = vadd.f32 %v388, %v450
      %v455 = vadd.f32 %v393, %v450
      %v456 = vadd.f32 %v398, %v450
      %v457 = vadd.f32 %v403, %v450
      %v458 = vadd.f32 %v408, %v450
      %v459 = vadd.f32 %v413, %v450
      %v460 = vadd.f32 %v418, %v450
      %v461 = vadd.f32 %v423, %v450
      %v462 = vadd.f32 %v428, %v450
      %v463 = vadd.f32 %v433, %v450
      %v464 = vadd.f32 %v438, %v450
      %v465 = vadd.f32 %v443, %v450
      %v466 = vadd.f32 %v448, %v450
      %v467 = vmul.f32 %v451, 0.2
      %v468 = vmul.f32 %v452, 0.2
      %v469 = vmul.f32 %v453, 0.2
      %v470 = vmul.f32 %v454, 0.2
      %v471 = vmul.f32 %v455, 0.2
      %v472 = vmul.f32 %v456, 0.2
      %v473 = vmul.f32 %v457, 0.2
      %v474 = vmul.f32 %v458, 0.2
      %v475 = vmul.f32 %v459, 0.2
      %v476 = vmul.f32 %v460, 0.2
      %v477 = vmul.f32 %v461, 0.2
      %v478 = vmul.f32 %v462, 0.2
      %v479 = vmul.f32 %v463, 0.2
      %v480 = vmul.f32 %v464, 0.2
      %v481 = vmul.f32 %v465, 0.2
      %v482 = vmul.f32 %v466, 0.2
      %v483 = vmax.f32 %v451, %v467
      %v484 = vmax.f32 %v452, %v468
      %v485 = vmax.f32 %v453, %v469
      %v486 = vmax.f32 %v454, %v470
      %v487 = vmax.f32 %v455, %v471
      %v488 = vmax.f32 %v456, %v472
      %v489 = vmax.f32 %v457, %v473
      %v490 = vmax.f32 %v458, %v474
      %v491 = vmax.f32 %v459, %v475
      %v492 = vmax.f32 %v460, %v476
      %v493 = vmax.f32 %v461, %v477
      %v494 = vmax.f32 %v462, %v478
      %v495 = vmax.f32 %v463, %v479
      %v496 = vmax.f32 %v464, %v480
      %v497 = vmax.f32 %v465, %v481
      %v498 = vmax.f32 %v466, %v482
      %v499 = vsel %vm213, 16843009, 0
      %v500 = vsel %vm214, 16843009, 0
      %v501 = vsel %vm215, 16843009, 0
      %v502 = vsel %vm216, 16843009, 0
      %v503 = vunpack.c.0.s8 %v499
      %v504 = vunpack.c.1.s8 %v499
      %v505 = vunpack.c.2.s8 %v499
      %v506 = vunpack.c.3.s8 %v499
      %v507 = vunpack.c.0.s8 %v500
      %v508 = vunpack.c.1.s8 %v500
      %v509 = vunpack.c.2.s8 %v500
      %v510 = vunpack.c.3.s8 %v500
      %v511 = vunpack.c.0.s8 %v501
      %v512 = vunpack.c.1.s8 %v501
      %v513 = vunpack.c.2.s8 %v501
      %v514 = vunpack.c.3.s8 %v501
      %v515 = vunpack.c.0.s8 %v502
      %v516 = vunpack.c.1.s8 %v502
      %v517 = vunpack.c.2.s8 %v502
      %v518 = vunpack.c.3.s8 %v502
      %v519 = vpack.c.b16 %v503, %v503
      %v520 = vpack.c.b8 %v519, %v519
      %v521 = vpack.c.b16 %v504, %v504
      %v522 = vpack.c.b8 %v521, %v521
      %v523 = vpack.c.b16 %v505, %v505
      %v524 = vpack.c.b8 %v523, %v523
      %v525 = vpack.c.b16 %v506, %v506
      %v526 = vpack.c.b8 %v525, %v525
      %v527 = vpack.c.b16 %v507, %v507
      %v528 = vpack.c.b8 %v527, %v527
      %v529 = vpack.c.b16 %v508, %v508
      %v530 = vpack.c.b8 %v529, %v529
      %v531 = vpack.c.b16 %v509, %v509
      %v532 = vpack.c.b8 %v531, %v531
      %v533 = vpack.c.b16 %v510, %v510
      %v534 = vpack.c.b8 %v533, %v533
      %v535 = vpack.c.b16 %v511, %v511
      %v536 = vpack.c.b8 %v535, %v535
      %v537 = vpack.c.b16 %v512, %v512
      %v538 = vpack.c.b8 %v537, %v537
      %v539 = vpack.c.b16 %v513, %v513
      %v540 = vpack.c.b8 %v539, %v539
      %v541 = vpack.c.b16 %v514, %v514
      %v542 = vpack.c.b8 %v541, %v541
      %v543 = vpack.c.b16 %v515, %v515
      %v544 = vpack.c.b8 %v543, %v543
      %v545 = vpack.c.b16 %v516, %v516
      %v546 = vpack.c.b8 %v545, %v545
      %v547 = vpack.c.b16 %v517, %v517
      %v548 = vpack.c.b8 %v547, %v547
      %v549 = vpack.c.b16 %v518, %v518
      %v550 = vpack.c.b8 %v549, %v549
      %vm551 = vnez %v520
      %vm552 = vnez %v522
      %vm553 = vnez %v524
      %vm554 = vnez %v526
      %vm555 = vnez %v528
      %vm556 = vnez %v530
      %vm557 = vnez %v532
      %vm558 = vnez %v534
      %vm559 = vnez %v536
      %vm560 = vnez %v538
      %vm561 = vnez %v540
      %vm562 = vnez %v542
      %vm563 = vnez %v544
      %vm564 = vnez %v546
      %vm565 = vnez %v548
      %vm566 = vnez %v550
      %v567 = vsel %vm551, 16843009, 0
      %v568 = vsel %vm552, 16843009, 0
      %v569 = vsel %vm553, 16843009, 0
      %v570 = vsel %vm554, 16843009, 0
      %v571 = vsel %vm555, 16843009, 0
      %v572 = vsel %vm556, 16843009, 0
      %v573 = vsel %vm557, 16843009, 0
      %v574 = vsel %vm558, 16843009, 0
      %v575 = vsel %vm559, 16843009, 0
      %v576 = vsel %vm560, 16843009, 0
      %v577 = vsel %vm561, 16843009, 0
      %v578 = vsel %vm562, 16843009, 0
      %v579 = vsel %vm563, 16843009, 0
      %v580 = vsel %vm564, 16843009, 0
      %v581 = vsel %vm565, 16843009, 0
      %v582 = vsel %vm566, 16843009, 0
      %v583 = vunpack.c.0.s8 %v567
      %v584 = vunpack.c.0.s8 %v568
      %v585 = vunpack.c.0.s8 %v569
      %v586 = vunpack.c.0.s8 %v570
      %v587 = vunpack.c.0.s8 %v571
      %v588 = vunpack.c.0.s8 %v572
      %v589 = vunpack.c.0.s8 %v573
      %v590 = vunpack.c.0.s8 %v574
      %v591 = vunpack.c.0.s8 %v575
      %v592 = vunpack.c.0.s8 %v576
      %v593 = vunpack.c.0.s8 %v577
      %v594 = vunpack.c.0.s8 %v578
      %v595 = vunpack.c.0.s8 %v579
      %v596 = vunpack.c.0.s8 %v580
      %v597 = vunpack.c.0.s8 %v581
      %v598 = vunpack.c.0.s8 %v582
      %vm599 = vcmp.ne.s32.totalorder %v583, 0
      %vm600 = vcmp.ne.s32.totalorder %v584, 0
      %vm601 = vcmp.ne.s32.totalorder %v585, 0
      %vm602 = vcmp.ne.s32.totalorder %v586, 0
      %vm603 = vcmp.ne.s32.totalorder %v587, 0
      %vm604 = vcmp.ne.s32.totalorder %v588, 0
      %vm605 = vcmp.ne.s32.totalorder %v589, 0
      %vm606 = vcmp.ne.s32.totalorder %v590, 0
      %vm607 = vcmp.ne.s32.totalorder %v591, 0
      %vm608 = vcmp.ne.s32.totalorder %v592, 0
      %vm609 = vcmp.ne.s32.totalorder %v593, 0
      %vm610 = vcmp.ne.s32.totalorder %v594, 0
      %vm611 = vcmp.ne.s32.totalorder %v595, 0
      %vm612 = vcmp.ne.s32.totalorder %v596, 0
      %vm613 = vcmp.ne.s32.totalorder %v597, 0
      %vm614 = vcmp.ne.s32.totalorder %v598, 0
      %v615 = vsel %vm599, %v483, -1e+30
      %v616 = vsel %vm600, %v484, -1e+30
      %v617 = vsel %vm601, %v485, -1e+30
      %v618 = vsel %vm602, %v486, -1e+30
      %v619 = vsel %vm603, %v487, -1e+30
      %v620 = vsel %vm604, %v488, -1e+30
      %v621 = vsel %vm605, %v489, -1e+30
      %v622 = vsel %vm606, %v490, -1e+30
      %v623 = vsel %vm607, %v491, -1e+30
      %v624 = vsel %vm608, %v492, -1e+30
      %v625 = vsel %vm609, %v493, -1e+30
      %v626 = vsel %vm610, %v494, -1e+30
      %v627 = vsel %vm611, %v495, -1e+30
      %v628 = vsel %vm612, %v496, -1e+30
      %v629 = vsel %vm613, %v497, -1e+30
      %v630 = vsel %vm614, %v498, -1e+30
      %631 = vmax.xlane.f32.xlu0 %v615
      %v632 = vpop.xlane.xlu0 %631
      %633 = vmax.xlane.f32.xlu0 %v616
      %v634 = vpop.xlane.xlu0 %633
      %635 = vmax.xlane.f32.xlu0 %v617
      %v636 = vpop.xlane.xlu0 %635
      %637 = vmax.xlane.f32.xlu0 %v618
      %v638 = vpop.xlane.xlu0 %637
      %639 = vmax.xlane.f32.xlu0 %v619
      %v640 = vpop.xlane.xlu0 %639
      %641 = vmax.xlane.f32.xlu0 %v620
      %v642 = vpop.xlane.xlu0 %641
      %643 = vmax.xlane.f32.xlu0 %v621
      %v644 = vpop.xlane.xlu0 %643
      %645 = vmax.xlane.f32.xlu0 %v622
      %v646 = vpop.xlane.xlu0 %645
      %647 = vmax.xlane.f32.xlu0 %v623
      %v648 = vpop.xlane.xlu0 %647
      %649 = vmax.xlane.f32.xlu0 %v624
      %v650 = vpop.xlane.xlu0 %649
      %651 = vmax.xlane.f32.xlu0 %v625
      %v652 = vpop.xlane.xlu0 %651
      %653 = vmax.xlane.f32.xlu0 %v626
      %v654 = vpop.xlane.xlu0 %653
      %655 = vmax.xlane.f32.xlu0 %v627
      %v656 = vpop.xlane.xlu0 %655
      %657 = vmax.xlane.f32.xlu0 %v628
      %v658 = vpop.xlane.xlu0 %657
      %659 = vmax.xlane.f32.xlu0 %v629
      %v660 = vpop.xlane.xlu0 %659
      %661 = vmax.xlane.f32.xlu0 %v630
      %v662 = vpop.xlane.xlu0 %661
      %v663 = vsub.f32 %v615, %v632
      %v664 = vsub.f32 %v616, %v634
      %v665 = vsub.f32 %v617, %v636
      %v666 = vsub.f32 %v618, %v638
      %v667 = vsub.f32 %v619, %v640
      %v668 = vsub.f32 %v620, %v642
      %v669 = vsub.f32 %v621, %v644
      %v670 = vsub.f32 %v622, %v646
      %v671 = vsub.f32 %v623, %v648
      %v672 = vsub.f32 %v624, %v650
      %v673 = vsub.f32 %v625, %v652
      %v674 = vsub.f32 %v626, %v654
      %v675 = vsub.f32 %v627, %v656
      %v676 = vsub.f32 %v628, %v658
      %v677 = vsub.f32 %v629, %v660
      %v678 = vsub.f32 %v630, %v662
      %v679 = vmul.f32 %v663, 1.442695
      %v680 = vpow.pop %v679
      %v681 = vmul.f32 %v664, 1.442695
      %v682 = vpow.pop %v681
      %v683 = vmul.f32 %v665, 1.442695
      %v684 = vpow.pop %v683
      %v685 = vmul.f32 %v666, 1.442695
      %v686 = vpow.pop %v685
      %v687 = vmul.f32 %v667, 1.442695
      %v688 = vpow.pop %v687
      %v689 = vmul.f32 %v668, 1.442695
      %v690 = vpow.pop %v689
      %v691 = vmul.f32 %v669, 1.442695
      %v692 = vpow.pop %v691
      %v693 = vmul.f32 %v670, 1.442695
      %v694 = vpow.pop %v693
      %v695 = vmul.f32 %v671, 1.442695
      %v696 = vpow.pop %v695
      %v697 = vmul.f32 %v672, 1.442695
      %v698 = vpow.pop %v697
      %v699 = vmul.f32 %v673, 1.442695
      %v700 = vpow.pop %v699
      %v701 = vmul.f32 %v674, 1.442695
      %v702 = vpow.pop %v701
      %v703 = vmul.f32 %v675, 1.442695
      %v704 = vpow.pop %v703
      %v705 = vmul.f32 %v676, 1.442695
      %v706 = vpow.pop %v705
      %v707 = vmul.f32 %v677, 1.442695
      %v708 = vpow.pop %v707
      %v709 = vmul.f32 %v678, 1.442695
      %v710 = vpow.pop %v709
      %711 = vmatpush.msra.mxu0 %v345
      %712 = vmatpush.msra.mxu0 %v342
      %713 = vmatpush.msra.mxu0 %v339
      %714 = vmatpush.msra.mxu0 %v336
      %715 = vmatpush.msra.mxu0 %v333
      %716 = vmatpush.msra.mxu0 %v330
      %717 = vmatpush.msra.mxu0 %v327
      %718 = vmatpush.msra.mxu0 %v324
      %719 = vmatpush.msra.mxu0 %v321
      %720 = vmatpush.msra.mxu0 %v318
      %721 = vmatpush.msra.mxu0 %v315
      %722 = vmatpush.msra.mxu0 %v312
      %723 = vmatpush.msra.mxu0 %v309
      %724 = vmatpush.msra.mxu0 %v306
      %725 = vmatpush.msra.mxu0 %v303
      %726 = vmatpush.msra.mxu0 %v300
      %727 = vmatmul.f32.gmra.mxu0 %v680
      %v728 = vpop.f32.mrf.mxu0
      %v729 = vadd.f32 0.0, %v728
      %730 = vmatmul.f32.gmra.mxu0 %v682
      %v731 = vpop.f32.mrf.mxu0
      %v732 = vadd.f32 0.0, %v731
      %733 = vmatmul.f32.gmra.mxu0 %v684
      %v734 = vpop.f32.mrf.mxu0
      %v735 = vadd.f32 0.0, %v734
      %736 = vmatmul.f32.gmra.mxu0 %v686
      %v737 = vpop.f32.mrf.mxu0
      %v738 = vadd.f32 0.0, %v737
      %739 = vmatmul.f32.gmra.mxu0 %v688
      %v740 = vpop.f32.mrf.mxu0
      %v741 = vadd.f32 0.0, %v740
      %742 = vmatmul.f32.gmra.mxu0 %v690
      %v743 = vpop.f32.mrf.mxu0
      %v744 = vadd.f32 0.0, %v743
      %745 = vmatmul.f32.gmra.mxu0 %v692
      %v746 = vpop.f32.mrf.mxu0
      %v747 = vadd.f32 0.0, %v746
      %748 = vmatmul.f32.gmra.mxu0 %v694
      %v749 = vpop.f32.mrf.mxu0
      %v750 = vadd.f32 0.0, %v749
      %751 = vmatmul.f32.gmra.mxu0 %v696
      %v752 = vpop.f32.mrf.mxu0
      %v753 = vadd.f32 0.0, %v752
      %754 = vmatmul.f32.gmra.mxu0 %v698
      %v755 = vpop.f32.mrf.mxu0
      %v756 = vadd.f32 0.0, %v755
      %757 = vmatmul.f32.gmra.mxu0 %v700
      %v758 = vpop.f32.mrf.mxu0
      %v759 = vadd.f32 0.0, %v758
      %760 = vmatmul.f32.gmra.mxu0 %v702
      %v761 = vpop.f32.mrf.mxu0
      %v762 = vadd.f32 0.0, %v761
      %763 = vmatmul.f32.gmra.mxu0 %v704
      %v764 = vpop.f32.mrf.mxu0
      %v765 = vadd.f32 0.0, %v764
      %766 = vmatmul.f32.gmra.mxu0 %v706
      %v767 = vpop.f32.mrf.mxu0
      %v768 = vadd.f32 0.0, %v767
      %769 = vmatmul.f32.gmra.mxu0 %v708
      %v770 = vpop.f32.mrf.mxu0
      %v771 = vadd.f32 0.0, %v770
      %772 = vmatmul.f32.gmra.mxu0 %v710
      %v773 = vpop.f32.mrf.mxu0
      %v774 = vadd.f32 0.0, %v773
      %775 = vdwg.mxu0
      %v776 = vrcp.pop %v729
      %v777 = vrcp.pop %v732
      %v778 = vrcp.pop %v735
      %v779 = vrcp.pop %v738
      %v780 = vrcp.pop %v741
      %v781 = vrcp.pop %v744
      %v782 = vrcp.pop %v747
      %v783 = vrcp.pop %v750
      %v784 = vrcp.pop %v753
      %v785 = vrcp.pop %v756
      %v786 = vrcp.pop %v759
      %v787 = vrcp.pop %v762
      %v788 = vrcp.pop %v765
      %v789 = vrcp.pop %v768
      %v790 = vrcp.pop %v771
      %v791 = vrcp.pop %v774
      %793 = vset.pattern.permute.xlu0 16
      %794 = vperm.xlu0 %793, %v776
      %v795 = vpop.permute.xlu0 %794
      %798 = vset.pattern.permute.xlu0 16
      %799 = vperm.xlu0 %798, %v777
      %v800 = vpop.permute.xlu0 %799
      %803 = vset.pattern.permute.xlu0 16
      %804 = vperm.xlu0 %803, %v778
      %v805 = vpop.permute.xlu0 %804
      %808 = vset.pattern.permute.xlu0 16
      %809 = vperm.xlu0 %808, %v779
      %v810 = vpop.permute.xlu0 %809
      %813 = vset.pattern.permute.xlu0 16
      %814 = vperm.xlu0 %813, %v780
      %v815 = vpop.permute.xlu0 %814
      %818 = vset.pattern.permute.xlu0 16
      %819 = vperm.xlu0 %818, %v781
      %v820 = vpop.permute.xlu0 %819
      %823 = vset.pattern.permute.xlu0 16
      %824 = vperm.xlu0 %823, %v782
      %v825 = vpop.permute.xlu0 %824
      %828 = vset.pattern.permute.xlu0 16
      %829 = vperm.xlu0 %828, %v783
      %v830 = vpop.permute.xlu0 %829
      %833 = vset.pattern.permute.xlu0 16
      %834 = vperm.xlu0 %833, %v784
      %v835 = vpop.permute.xlu0 %834
      %838 = vset.pattern.permute.xlu0 16
      %839 = vperm.xlu0 %838, %v785
      %v840 = vpop.permute.xlu0 %839
      %843 = vset.pattern.permute.xlu0 16
      %844 = vperm.xlu0 %843, %v786
      %v845 = vpop.permute.xlu0 %844
      %848 = vset.pattern.permute.xlu0 16
      %849 = vperm.xlu0 %848, %v787
      %v850 = vpop.permute.xlu0 %849
      %853 = vset.pattern.permute.xlu0 16
      %854 = vperm.xlu0 %853, %v788
      %v855 = vpop.permute.xlu0 %854
      %858 = vset.pattern.permute.xlu0 16
      %859 = vperm.xlu0 %858, %v789
      %v860 = vpop.permute.xlu0 %859
      %863 = vset.pattern.permute.xlu0 16
      %864 = vperm.xlu0 %863, %v790
      %v865 = vpop.permute.xlu0 %864
      %868 = vset.pattern.permute.xlu0 16
      %869 = vperm.xlu0 %868, %v791
      %v870 = vpop.permute.xlu0 %869
      %v872 = vmul.f32 %v729, %v795
      %v873 = vmul.f32 %v732, %v800
      %v874 = vmul.f32 %v735, %v805
      %v875 = vmul.f32 %v738, %v810
      %v876 = vmul.f32 %v741, %v815
      %v877 = vmul.f32 %v744, %v820
      %v878 = vmul.f32 %v747, %v825
      %v879 = vmul.f32 %v750, %v830
      %v880 = vmul.f32 %v753, %v835
      %v881 = vmul.f32 %v756, %v840
      %v882 = vmul.f32 %v759, %v845
      %v883 = vmul.f32 %v762, %v850
      %v884 = vmul.f32 %v765, %v855
      %v885 = vmul.f32 %v768, %v860
      %v886 = vmul.f32 %v771, %v865
      %v887 = vmul.f32 %v774, %v870
      %v888 = vperm.slane %v227, 0
      %v889 = vadd.f32 %v872, %v888
      %v890 = vadd.f32 %v873, %v888
      %v891 = vadd.f32 %v874, %v888
      %v892 = vadd.f32 %v875, %v888
      %v893 = vadd.f32 %v876, %v888
      %v894 = vadd.f32 %v877, %v888
      %v895 = vadd.f32 %v878, %v888
      %v896 = vadd.f32 %v879, %v888
      %v897 = vadd.f32 %v880, %v888
      %v898 = vadd.f32 %v881, %v888
      %v899 = vadd.f32 %v882, %v888
      %v900 = vadd.f32 %v883, %v888
      %v901 = vadd.f32 %v884, %v888
      %v902 = vadd.f32 %v885, %v888
      %v903 = vadd.f32 %v886, %v888
      %v904 = vadd.f32 %v887, %v888
      %v905 = vmax.f32 %v889, 0.0
      %v906 = vmax.f32 %v890, 0.0
      %v907 = vmax.f32 %v891, 0.0
      %v908 = vmax.f32 %v892, 0.0
      %v909 = vmax.f32 %v893, 0.0
      %v910 = vmax.f32 %v894, 0.0
      %v911 = vmax.f32 %v895, 0.0
      %v912 = vmax.f32 %v896, 0.0
      %v913 = vmax.f32 %v897, 0.0
      %v914 = vmax.f32 %v898, 0.0
      %v915 = vmax.f32 %v899, 0.0
      %v916 = vmax.f32 %v900, 0.0
      %v917 = vmax.f32 %v901, 0.0
      %v918 = vmax.f32 %v902, 0.0
      %v919 = vmax.f32 %v903, 0.0
      %v920 = vmax.f32 %v904, 0.0
      %vm921 = vcmask 138240
      %v923 = vsel %vm921, %v905, 0
      %v926 = vsel %vm921, %v906, 0
      %v929 = vsel %vm921, %v907, 0
      %v932 = vsel %vm921, %v908, 0
      %v935 = vsel %vm921, %v909, 0
      %v938 = vsel %vm921, %v910, 0
      %v941 = vsel %vm921, %v911, 0
      %v944 = vsel %vm921, %v912, 0
      %v947 = vsel %vm921, %v913, 0
      %v950 = vsel %vm921, %v914, 0
      %v953 = vsel %vm921, %v915, 0
      %v956 = vsel %vm921, %v916, 0
      %v959 = vsel %vm921, %v917, 0
      %v962 = vsel %vm921, %v918, 0
      %v965 = vsel %vm921, %v919, 0
      %v968 = vsel %vm921, %v920, 0
      %v971 = vsel %vm278, %v224, 0
      %973 = vmatpush.msra.mxu0 0.0
      %974 = vmatpush.msra.mxu0 0.0
      %975 = vmatpush.msra.mxu0 0.0
      %976 = vmatpush.msra.mxu0 0.0
      %977 = vmatpush.msra.mxu0 0.0
      %978 = vmatpush.msra.mxu0 0.0
      %979 = vmatpush.msra.mxu0 0.0
      %980 = vmatpush.msra.mxu0 0.0
      %981 = vmatpush.msra.mxu0 0.0
      %982 = vmatpush.msra.mxu0 0.0
      %983 = vmatpush.msra.mxu0 0.0
      %984 = vmatpush.msra.mxu0 0.0
      %985 = vmatpush.msra.mxu0 0.0
      %986 = vmatpush.msra.mxu0 %v971
      %987 = vmatpush.msra.mxu0 %v223
      %988 = vmatpush.msra.mxu0 %v222
      %989 = vmatmul.f32.gmra.mxu0 %v923
      %v990 = vpop.f32.mrf.mxu0
      %v991 = vadd.f32 0.0, %v990
      %992 = vmatmul.f32.gmra.mxu0 %v926
      %v993 = vpop.f32.mrf.mxu0
      %v994 = vadd.f32 0.0, %v993
      %995 = vmatmul.f32.gmra.mxu0 %v929
      %v996 = vpop.f32.mrf.mxu0
      %v997 = vadd.f32 0.0, %v996
      %998 = vmatmul.f32.gmra.mxu0 %v932
      %v999 = vpop.f32.mrf.mxu0
      %v1000 = vadd.f32 0.0, %v999
      %1001 = vmatmul.f32.gmra.mxu0 %v935
      %v1002 = vpop.f32.mrf.mxu0
      %v1003 = vadd.f32 0.0, %v1002
      %1004 = vmatmul.f32.gmra.mxu0 %v938
      %v1005 = vpop.f32.mrf.mxu0
      %v1006 = vadd.f32 0.0, %v1005
      %1007 = vmatmul.f32.gmra.mxu0 %v941
      %v1008 = vpop.f32.mrf.mxu0
      %v1009 = vadd.f32 0.0, %v1008
      %1010 = vmatmul.f32.gmra.mxu0 %v944
      %v1011 = vpop.f32.mrf.mxu0
      %v1012 = vadd.f32 0.0, %v1011
      %1013 = vmatmul.f32.gmra.mxu0 %v947
      %v1014 = vpop.f32.mrf.mxu0
      %v1015 = vadd.f32 0.0, %v1014
      %1016 = vmatmul.f32.gmra.mxu0 %v950
      %v1017 = vpop.f32.mrf.mxu0
      %v1018 = vadd.f32 0.0, %v1017
      %1019 = vmatmul.f32.gmra.mxu0 %v953
      %v1020 = vpop.f32.mrf.mxu0
      %v1021 = vadd.f32 0.0, %v1020
      %1022 = vmatmul.f32.gmra.mxu0 %v956
      %v1023 = vpop.f32.mrf.mxu0
      %v1024 = vadd.f32 0.0, %v1023
      %1025 = vmatmul.f32.gmra.mxu0 %v959
      %v1026 = vpop.f32.mrf.mxu0
      %v1027 = vadd.f32 0.0, %v1026
      %1028 = vmatmul.f32.gmra.mxu0 %v962
      %v1029 = vpop.f32.mrf.mxu0
      %v1030 = vadd.f32 0.0, %v1029
      %1031 = vmatmul.f32.gmra.mxu0 %v965
      %v1032 = vpop.f32.mrf.mxu0
      %v1033 = vadd.f32 0.0, %v1032
      %1034 = vmatmul.f32.gmra.mxu0 %v968
      %v1035 = vpop.f32.mrf.mxu0
      %v1036 = vadd.f32 0.0, %v1035
      %1037 = vdwg.mxu0
      %v1039 = vsel %vm921, %v226, 0
      %1041 = vmatpush.xpose.msra.mxu0 %v968
      %1042 = vmatpush.xpose.msra.mxu0 %v965
      %1043 = vmatpush.xpose.msra.mxu0 %v962
      %1044 = vmatpush.xpose.msra.mxu0 %v959
      %1045 = vmatpush.xpose.msra.mxu0 %v956
      %1046 = vmatpush.xpose.msra.mxu0 %v953
      %1047 = vmatpush.xpose.msra.mxu0 %v950
      %1048 = vmatpush.xpose.msra.mxu0 %v947
      %1049 = vmatpush.xpose.msra.mxu0 %v944
      %1050 = vmatpush.xpose.msra.mxu0 %v941
      %1051 = vmatpush.xpose.msra.mxu0 %v938
      %1052 = vmatpush.xpose.msra.mxu0 %v935
      %1053 = vmatpush.xpose.msra.mxu0 %v932
      %1054 = vmatpush.xpose.msra.mxu0 %v929
      %1055 = vmatpush.xpose.msra.mxu0 %v926
      %1056 = vmatpush.xpose.msra.mxu0 %v923
      %1057 = vmatmul.f32.gmra.mxu0 %v1039
      %v1058 = vpop.f32.mrf.mxu0
      %v1059 = vadd.f32 0.0, %v1058
      %1060 = vdwg.mxu0
      %1062 = vset.pattern.permute.xlu0 9
      %1063 = vperm.xlu0 %1062, %v991
      %v1064 = vpop.permute.xlu0 %1063
      %1067 = vset.pattern.permute.xlu0 9
      %1068 = vperm.xlu0 %1067, %v994
      %v1069 = vpop.permute.xlu0 %1068
      %1072 = vset.pattern.permute.xlu0 9
      %1073 = vperm.xlu0 %1072, %v997
      %v1074 = vpop.permute.xlu0 %1073
      %1077 = vset.pattern.permute.xlu0 9
      %1078 = vperm.xlu0 %1077, %v1000
      %v1079 = vpop.permute.xlu0 %1078
      %1082 = vset.pattern.permute.xlu0 9
      %1083 = vperm.xlu0 %1082, %v1003
      %v1084 = vpop.permute.xlu0 %1083
      %1087 = vset.pattern.permute.xlu0 9
      %1088 = vperm.xlu0 %1087, %v1006
      %v1089 = vpop.permute.xlu0 %1088
      %1092 = vset.pattern.permute.xlu0 9
      %1093 = vperm.xlu0 %1092, %v1009
      %v1094 = vpop.permute.xlu0 %1093
      %1097 = vset.pattern.permute.xlu0 9
      %1098 = vperm.xlu0 %1097, %v1012
      %v1099 = vpop.permute.xlu0 %1098
      %1102 = vset.pattern.permute.xlu0 9
      %1103 = vperm.xlu0 %1102, %v1015
      %v1104 = vpop.permute.xlu0 %1103
      %1107 = vset.pattern.permute.xlu0 9
      %1108 = vperm.xlu0 %1107, %v1018
      %v1109 = vpop.permute.xlu0 %1108
      %1112 = vset.pattern.permute.xlu0 9
      %1113 = vperm.xlu0 %1112, %v1021
      %v1114 = vpop.permute.xlu0 %1113
      %1117 = vset.pattern.permute.xlu0 9
      %1118 = vperm.xlu0 %1117, %v1024
      %v1119 = vpop.permute.xlu0 %1118
      %1122 = vset.pattern.permute.xlu0 9
      %1123 = vperm.xlu0 %1122, %v1027
      %v1124 = vpop.permute.xlu0 %1123
      %1127 = vset.pattern.permute.xlu0 9
      %1128 = vperm.xlu0 %1127, %v1030
      %v1129 = vpop.permute.xlu0 %1128
      %1132 = vset.pattern.permute.xlu0 9
      %1133 = vperm.xlu0 %1132, %v1033
      %v1134 = vpop.permute.xlu0 %1133
      %1137 = vset.pattern.permute.xlu0 9
      %1138 = vperm.xlu0 %1137, %v1036
      %v1139 = vpop.permute.xlu0 %1138
      %v1141 = vperm.slane %v1059, 0
      %v1142 = vadd.f32 %v1064, %v1141
      %v1143 = vadd.f32 %v1069, %v1141
      %v1144 = vadd.f32 %v1074, %v1141
      %v1145 = vadd.f32 %v1079, %v1141
      %v1146 = vadd.f32 %v1084, %v1141
      %v1147 = vadd.f32 %v1089, %v1141
      %v1148 = vadd.f32 %v1094, %v1141
      %v1149 = vadd.f32 %v1099, %v1141
      %v1150 = vadd.f32 %v1104, %v1141
      %v1151 = vadd.f32 %v1109, %v1141
      %v1152 = vadd.f32 %v1114, %v1141
      %v1153 = vadd.f32 %v1119, %v1141
      %v1154 = vadd.f32 %v1124, %v1141
      %v1155 = vadd.f32 %v1129, %v1141
      %v1156 = vadd.f32 %v1134, %v1141
      %v1157 = vadd.f32 %v1139, %v1141
      %v1158 = vmul.f32 %v1142, 0.2
      %v1159 = vmul.f32 %v1143, 0.2
      %v1160 = vmul.f32 %v1144, 0.2
      %v1161 = vmul.f32 %v1145, 0.2
      %v1162 = vmul.f32 %v1146, 0.2
      %v1163 = vmul.f32 %v1147, 0.2
      %v1164 = vmul.f32 %v1148, 0.2
      %v1165 = vmul.f32 %v1149, 0.2
      %v1166 = vmul.f32 %v1150, 0.2
      %v1167 = vmul.f32 %v1151, 0.2
      %v1168 = vmul.f32 %v1152, 0.2
      %v1169 = vmul.f32 %v1153, 0.2
      %v1170 = vmul.f32 %v1154, 0.2
      %v1171 = vmul.f32 %v1155, 0.2
      %v1172 = vmul.f32 %v1156, 0.2
      %v1173 = vmul.f32 %v1157, 0.2
      %v1174 = vmax.f32 %v1142, %v1158
      %v1175 = vmax.f32 %v1143, %v1159
      %v1176 = vmax.f32 %v1144, %v1160
      %v1177 = vmax.f32 %v1145, %v1161
      %v1178 = vmax.f32 %v1146, %v1162
      %v1179 = vmax.f32 %v1147, %v1163
      %v1180 = vmax.f32 %v1148, %v1164
      %v1181 = vmax.f32 %v1149, %v1165
      %v1182 = vmax.f32 %v1150, %v1166
      %v1183 = vmax.f32 %v1151, %v1167
      %v1184 = vmax.f32 %v1152, %v1168
      %v1185 = vmax.f32 %v1153, %v1169
      %v1186 = vmax.f32 %v1154, %v1170
      %v1187 = vmax.f32 %v1155, %v1171
      %v1188 = vmax.f32 %v1156, %v1172
      %v1189 = vmax.f32 %v1157, %v1173
      %v1190 = vsel %vm599, %v1174, -1e+30
      %v1191 = vsel %vm600, %v1175, -1e+30
      %v1192 = vsel %vm601, %v1176, -1e+30
      %v1193 = vsel %vm602, %v1177, -1e+30
      %v1194 = vsel %vm603, %v1178, -1e+30
      %v1195 = vsel %vm604, %v1179, -1e+30
      %v1196 = vsel %vm605, %v1180, -1e+30
      %v1197 = vsel %vm606, %v1181, -1e+30
      %v1198 = vsel %vm607, %v1182, -1e+30
      %v1199 = vsel %vm608, %v1183, -1e+30
      %v1200 = vsel %vm609, %v1184, -1e+30
      %v1201 = vsel %vm610, %v1185, -1e+30
      %v1202 = vsel %vm611, %v1186, -1e+30
      %v1203 = vsel %vm612, %v1187, -1e+30
      %v1204 = vsel %vm613, %v1188, -1e+30
      %v1205 = vsel %vm614, %v1189, -1e+30
      %1206 = vmax.xlane.f32.xlu0 %v1190
      %v1207 = vpop.xlane.xlu0 %1206
      %1208 = vmax.xlane.f32.xlu0 %v1191
      %v1209 = vpop.xlane.xlu0 %1208
      %1210 = vmax.xlane.f32.xlu0 %v1192
      %v1211 = vpop.xlane.xlu0 %1210
      %1212 = vmax.xlane.f32.xlu0 %v1193
      %v1213 = vpop.xlane.xlu0 %1212
      %1214 = vmax.xlane.f32.xlu0 %v1194
      %v1215 = vpop.xlane.xlu0 %1214
      %1216 = vmax.xlane.f32.xlu0 %v1195
      %v1217 = vpop.xlane.xlu0 %1216
      %1218 = vmax.xlane.f32.xlu0 %v1196
      %v1219 = vpop.xlane.xlu0 %1218
      %1220 = vmax.xlane.f32.xlu0 %v1197
      %v1221 = vpop.xlane.xlu0 %1220
      %1222 = vmax.xlane.f32.xlu0 %v1198
      %v1223 = vpop.xlane.xlu0 %1222
      %1224 = vmax.xlane.f32.xlu0 %v1199
      %v1225 = vpop.xlane.xlu0 %1224
      %1226 = vmax.xlane.f32.xlu0 %v1200
      %v1227 = vpop.xlane.xlu0 %1226
      %1228 = vmax.xlane.f32.xlu0 %v1201
      %v1229 = vpop.xlane.xlu0 %1228
      %1230 = vmax.xlane.f32.xlu0 %v1202
      %v1231 = vpop.xlane.xlu0 %1230
      %1232 = vmax.xlane.f32.xlu0 %v1203
      %v1233 = vpop.xlane.xlu0 %1232
      %1234 = vmax.xlane.f32.xlu0 %v1204
      %v1235 = vpop.xlane.xlu0 %1234
      %1236 = vmax.xlane.f32.xlu0 %v1205
      %v1237 = vpop.xlane.xlu0 %1236
      %v1238 = vsub.f32 %v1190, %v1207
      %v1239 = vsub.f32 %v1191, %v1209
      %v1240 = vsub.f32 %v1192, %v1211
      %v1241 = vsub.f32 %v1193, %v1213
      %v1242 = vsub.f32 %v1194, %v1215
      %v1243 = vsub.f32 %v1195, %v1217
      %v1244 = vsub.f32 %v1196, %v1219
      %v1245 = vsub.f32 %v1197, %v1221
      %v1246 = vsub.f32 %v1198, %v1223
      %v1247 = vsub.f32 %v1199, %v1225
      %v1248 = vsub.f32 %v1200, %v1227
      %v1249 = vsub.f32 %v1201, %v1229
      %v1250 = vsub.f32 %v1202, %v1231
      %v1251 = vsub.f32 %v1203, %v1233
      %v1252 = vsub.f32 %v1204, %v1235
      %v1253 = vsub.f32 %v1205, %v1237
      %v1254 = vmul.f32 %v1238, 1.442695
      %v1255 = vpow.pop %v1254
      %v1256 = vmul.f32 %v1239, 1.442695
      %v1257 = vpow.pop %v1256
      %v1258 = vmul.f32 %v1240, 1.442695
      %v1259 = vpow.pop %v1258
      %v1260 = vmul.f32 %v1241, 1.442695
      %v1261 = vpow.pop %v1260
      %v1262 = vmul.f32 %v1242, 1.442695
      %v1263 = vpow.pop %v1262
      %v1264 = vmul.f32 %v1243, 1.442695
      %v1265 = vpow.pop %v1264
      %v1266 = vmul.f32 %v1244, 1.442695
      %v1267 = vpow.pop %v1266
      %v1268 = vmul.f32 %v1245, 1.442695
      %v1269 = vpow.pop %v1268
      %v1270 = vmul.f32 %v1246, 1.442695
      %v1271 = vpow.pop %v1270
      %v1272 = vmul.f32 %v1247, 1.442695
      %v1273 = vpow.pop %v1272
      %v1274 = vmul.f32 %v1248, 1.442695
      %v1275 = vpow.pop %v1274
      %v1276 = vmul.f32 %v1249, 1.442695
      %v1277 = vpow.pop %v1276
      %v1278 = vmul.f32 %v1250, 1.442695
      %v1279 = vpow.pop %v1278
      %v1280 = vmul.f32 %v1251, 1.442695
      %v1281 = vpow.pop %v1280
      %v1282 = vmul.f32 %v1252, 1.442695
      %v1283 = vpow.pop %v1282
      %v1284 = vmul.f32 %v1253, 1.442695
      %v1285 = vpow.pop %v1284
      %1286 = vmatpush.msra.mxu0 %v1036
      %1287 = vmatpush.msra.mxu0 %v1033
      %1288 = vmatpush.msra.mxu0 %v1030
      %1289 = vmatpush.msra.mxu0 %v1027
      %1290 = vmatpush.msra.mxu0 %v1024
      %1291 = vmatpush.msra.mxu0 %v1021
      %1292 = vmatpush.msra.mxu0 %v1018
      %1293 = vmatpush.msra.mxu0 %v1015
      %1294 = vmatpush.msra.mxu0 %v1012
      %1295 = vmatpush.msra.mxu0 %v1009
      %1296 = vmatpush.msra.mxu0 %v1006
      %1297 = vmatpush.msra.mxu0 %v1003
      %1298 = vmatpush.msra.mxu0 %v1000
      %1299 = vmatpush.msra.mxu0 %v997
      %1300 = vmatpush.msra.mxu0 %v994
      %1301 = vmatpush.msra.mxu0 %v991
      %1302 = vmatmul.f32.gmra.mxu0 %v1255
      %v1303 = vpop.f32.mrf.mxu0
      %v1304 = vadd.f32 0.0, %v1303
      %1305 = vmatmul.f32.gmra.mxu0 %v1257
      %v1306 = vpop.f32.mrf.mxu0
      %v1307 = vadd.f32 0.0, %v1306
      %1308 = vmatmul.f32.gmra.mxu0 %v1259
      %v1309 = vpop.f32.mrf.mxu0
      %v1310 = vadd.f32 0.0, %v1309
      %1311 = vmatmul.f32.gmra.mxu0 %v1261
      %v1312 = vpop.f32.mrf.mxu0
      %v1313 = vadd.f32 0.0, %v1312
      %1314 = vmatmul.f32.gmra.mxu0 %v1263
      %v1315 = vpop.f32.mrf.mxu0
      %v1316 = vadd.f32 0.0, %v1315
      %1317 = vmatmul.f32.gmra.mxu0 %v1265
      %v1318 = vpop.f32.mrf.mxu0
      %v1319 = vadd.f32 0.0, %v1318
      %1320 = vmatmul.f32.gmra.mxu0 %v1267
      %v1321 = vpop.f32.mrf.mxu0
      %v1322 = vadd.f32 0.0, %v1321
      %1323 = vmatmul.f32.gmra.mxu0 %v1269
      %v1324 = vpop.f32.mrf.mxu0
      %v1325 = vadd.f32 0.0, %v1324
      %1326 = vmatmul.f32.gmra.mxu0 %v1271
      %v1327 = vpop.f32.mrf.mxu0
      %v1328 = vadd.f32 0.0, %v1327
      %1329 = vmatmul.f32.gmra.mxu0 %v1273
      %v1330 = vpop.f32.mrf.mxu0
      %v1331 = vadd.f32 0.0, %v1330
      %1332 = vmatmul.f32.gmra.mxu0 %v1275
      %v1333 = vpop.f32.mrf.mxu0
      %v1334 = vadd.f32 0.0, %v1333
      %1335 = vmatmul.f32.gmra.mxu0 %v1277
      %v1336 = vpop.f32.mrf.mxu0
      %v1337 = vadd.f32 0.0, %v1336
      %1338 = vmatmul.f32.gmra.mxu0 %v1279
      %v1339 = vpop.f32.mrf.mxu0
      %v1340 = vadd.f32 0.0, %v1339
      %1341 = vmatmul.f32.gmra.mxu0 %v1281
      %v1342 = vpop.f32.mrf.mxu0
      %v1343 = vadd.f32 0.0, %v1342
      %1344 = vmatmul.f32.gmra.mxu0 %v1283
      %v1345 = vpop.f32.mrf.mxu0
      %v1346 = vadd.f32 0.0, %v1345
      %1347 = vmatmul.f32.gmra.mxu0 %v1285
      %v1348 = vpop.f32.mrf.mxu0
      %v1349 = vadd.f32 0.0, %v1348
      %1350 = vdwg.mxu0
      %v1351 = vrcp.pop %v1304
      %v1352 = vrcp.pop %v1307
      %v1353 = vrcp.pop %v1310
      %v1354 = vrcp.pop %v1313
      %v1355 = vrcp.pop %v1316
      %v1356 = vrcp.pop %v1319
      %v1357 = vrcp.pop %v1322
      %v1358 = vrcp.pop %v1325
      %v1359 = vrcp.pop %v1328
      %v1360 = vrcp.pop %v1331
      %v1361 = vrcp.pop %v1334
      %v1362 = vrcp.pop %v1337
      %v1363 = vrcp.pop %v1340
      %v1364 = vrcp.pop %v1343
      %v1365 = vrcp.pop %v1346
      %v1366 = vrcp.pop %v1349
      %1368 = vset.pattern.permute.xlu0 8
      %1369 = vperm.xlu0 %1368, %v1351
      %v1370 = vpop.permute.xlu0 %1369
      %1373 = vset.pattern.permute.xlu0 8
      %1374 = vperm.xlu0 %1373, %v1352
      %v1375 = vpop.permute.xlu0 %1374
      %1378 = vset.pattern.permute.xlu0 8
      %1379 = vperm.xlu0 %1378, %v1353
      %v1380 = vpop.permute.xlu0 %1379
      %1383 = vset.pattern.permute.xlu0 8
      %1384 = vperm.xlu0 %1383, %v1354
      %v1385 = vpop.permute.xlu0 %1384
      %1388 = vset.pattern.permute.xlu0 8
      %1389 = vperm.xlu0 %1388, %v1355
      %v1390 = vpop.permute.xlu0 %1389
      %1393 = vset.pattern.permute.xlu0 8
      %1394 = vperm.xlu0 %1393, %v1356
      %v1395 = vpop.permute.xlu0 %1394
      %1398 = vset.pattern.permute.xlu0 8
      %1399 = vperm.xlu0 %1398, %v1357
      %v1400 = vpop.permute.xlu0 %1399
      %1403 = vset.pattern.permute.xlu0 8
      %1404 = vperm.xlu0 %1403, %v1358
      %v1405 = vpop.permute.xlu0 %1404
      %1408 = vset.pattern.permute.xlu0 8
      %1409 = vperm.xlu0 %1408, %v1359
      %v1410 = vpop.permute.xlu0 %1409
      %1413 = vset.pattern.permute.xlu0 8
      %1414 = vperm.xlu0 %1413, %v1360
      %v1415 = vpop.permute.xlu0 %1414
      %1418 = vset.pattern.permute.xlu0 8
      %1419 = vperm.xlu0 %1418, %v1361
      %v1420 = vpop.permute.xlu0 %1419
      %1423 = vset.pattern.permute.xlu0 8
      %1424 = vperm.xlu0 %1423, %v1362
      %v1425 = vpop.permute.xlu0 %1424
      %1428 = vset.pattern.permute.xlu0 8
      %1429 = vperm.xlu0 %1428, %v1363
      %v1430 = vpop.permute.xlu0 %1429
      %1433 = vset.pattern.permute.xlu0 8
      %1434 = vperm.xlu0 %1433, %v1364
      %v1435 = vpop.permute.xlu0 %1434
      %1438 = vset.pattern.permute.xlu0 8
      %1439 = vperm.xlu0 %1438, %v1365
      %v1440 = vpop.permute.xlu0 %1439
      %1443 = vset.pattern.permute.xlu0 8
      %1444 = vperm.xlu0 %1443, %v1366
      %v1445 = vpop.permute.xlu0 %1444
      %v1447 = vmul.f32 %v1304, %v1370
      %v1448 = vmul.f32 %v1307, %v1375
      %v1449 = vmul.f32 %v1310, %v1380
      %v1450 = vmul.f32 %v1313, %v1385
      %v1451 = vmul.f32 %v1316, %v1390
      %v1452 = vmul.f32 %v1319, %v1395
      %v1453 = vmul.f32 %v1322, %v1400
      %v1454 = vmul.f32 %v1325, %v1405
      %v1455 = vmul.f32 %v1328, %v1410
      %v1456 = vmul.f32 %v1331, %v1415
      %v1457 = vmul.f32 %v1334, %v1420
      %v1458 = vmul.f32 %v1337, %v1425
      %v1459 = vmul.f32 %v1340, %v1430
      %v1460 = vmul.f32 %v1343, %v1435
      %v1461 = vmul.f32 %v1346, %v1440
      %v1462 = vmul.f32 %v1349, %v1445
      %v1463 = vperm.slane %v228, 0
      %v1464 = vadd.f32 %v1447, %v1463
      %v1465 = vadd.f32 %v1448, %v1463
      %v1466 = vadd.f32 %v1449, %v1463
      %v1467 = vadd.f32 %v1450, %v1463
      %v1468 = vadd.f32 %v1451, %v1463
      %v1469 = vadd.f32 %v1452, %v1463
      %v1470 = vadd.f32 %v1453, %v1463
      %v1471 = vadd.f32 %v1454, %v1463
      %v1472 = vadd.f32 %v1455, %v1463
      %v1473 = vadd.f32 %v1456, %v1463
      %v1474 = vadd.f32 %v1457, %v1463
      %v1475 = vadd.f32 %v1458, %v1463
      %v1476 = vadd.f32 %v1459, %v1463
      %v1477 = vadd.f32 %v1460, %v1463
      %v1478 = vadd.f32 %v1461, %v1463
      %v1479 = vadd.f32 %v1462, %v1463
      %vm1480 = vcmask 64512
      %v1481 = vsel %vm1480, %v1464, -inf
      %1482 = vmax.xlane.f32.xlu0 %v1481
      %v1483 = vpop.xlane.xlu0 %1482
      %v1484 = vsel %vm1480, %v1465, -inf
      %1485 = vmax.xlane.f32.xlu0 %v1484
      %v1486 = vpop.xlane.xlu0 %1485
      %v1487 = vsel %vm1480, %v1466, -inf
      %1488 = vmax.xlane.f32.xlu0 %v1487
      %v1489 = vpop.xlane.xlu0 %1488
      %v1490 = vsel %vm1480, %v1467, -inf
      %1491 = vmax.xlane.f32.xlu0 %v1490
      %v1492 = vpop.xlane.xlu0 %1491
      %v1493 = vsel %vm1480, %v1468, -inf
      %1494 = vmax.xlane.f32.xlu0 %v1493
      %v1495 = vpop.xlane.xlu0 %1494
      %v1496 = vsel %vm1480, %v1469, -inf
      %1497 = vmax.xlane.f32.xlu0 %v1496
      %v1498 = vpop.xlane.xlu0 %1497
      %v1499 = vsel %vm1480, %v1470, -inf
      %1500 = vmax.xlane.f32.xlu0 %v1499
      %v1501 = vpop.xlane.xlu0 %1500
      %v1502 = vsel %vm1480, %v1471, -inf
      %1503 = vmax.xlane.f32.xlu0 %v1502
      %v1504 = vpop.xlane.xlu0 %1503
      %v1505 = vsel %vm1480, %v1472, -inf
      %1506 = vmax.xlane.f32.xlu0 %v1505
      %v1507 = vpop.xlane.xlu0 %1506
      %v1508 = vsel %vm1480, %v1473, -inf
      %1509 = vmax.xlane.f32.xlu0 %v1508
      %v1510 = vpop.xlane.xlu0 %1509
      %v1511 = vsel %vm1480, %v1474, -inf
      %1512 = vmax.xlane.f32.xlu0 %v1511
      %v1513 = vpop.xlane.xlu0 %1512
      %v1514 = vsel %vm1480, %v1475, -inf
      %1515 = vmax.xlane.f32.xlu0 %v1514
      %v1516 = vpop.xlane.xlu0 %1515
      %v1517 = vsel %vm1480, %v1476, -inf
      %1518 = vmax.xlane.f32.xlu0 %v1517
      %v1519 = vpop.xlane.xlu0 %1518
      %v1520 = vsel %vm1480, %v1477, -inf
      %1521 = vmax.xlane.f32.xlu0 %v1520
      %v1522 = vpop.xlane.xlu0 %1521
      %v1523 = vsel %vm1480, %v1478, -inf
      %1524 = vmax.xlane.f32.xlu0 %v1523
      %v1525 = vpop.xlane.xlu0 %1524
      %v1526 = vsel %vm1480, %v1479, -inf
      %1527 = vmax.xlane.f32.xlu0 %v1526
      %v1528 = vpop.xlane.xlu0 %1527
      %v1529 = vsub.f32 %v1464, %v1483
      %v1530 = vsub.f32 %v1465, %v1486
      %v1531 = vsub.f32 %v1466, %v1489
      %v1532 = vsub.f32 %v1467, %v1492
      %v1533 = vsub.f32 %v1468, %v1495
      %v1534 = vsub.f32 %v1469, %v1498
      %v1535 = vsub.f32 %v1470, %v1501
      %v1536 = vsub.f32 %v1471, %v1504
      %v1537 = vsub.f32 %v1472, %v1507
      %v1538 = vsub.f32 %v1473, %v1510
      %v1539 = vsub.f32 %v1474, %v1513
      %v1540 = vsub.f32 %v1475, %v1516
      %v1541 = vsub.f32 %v1476, %v1519
      %v1542 = vsub.f32 %v1477, %v1522
      %v1543 = vsub.f32 %v1478, %v1525
      %v1544 = vsub.f32 %v1479, %v1528
      %v1545 = vmul.f32 %v1529, 1.442695
      %v1546 = vpow.pop %v1545
      %v1547 = vmul.f32 %v1530, 1.442695
      %v1548 = vpow.pop %v1547
      %v1549 = vmul.f32 %v1531, 1.442695
      %v1550 = vpow.pop %v1549
      %v1551 = vmul.f32 %v1532, 1.442695
      %v1552 = vpow.pop %v1551
      %v1553 = vmul.f32 %v1533, 1.442695
      %v1554 = vpow.pop %v1553
      %v1555 = vmul.f32 %v1534, 1.442695
      %v1556 = vpow.pop %v1555
      %v1557 = vmul.f32 %v1535, 1.442695
      %v1558 = vpow.pop %v1557
      %v1559 = vmul.f32 %v1536, 1.442695
      %v1560 = vpow.pop %v1559
      %v1561 = vmul.f32 %v1537, 1.442695
      %v1562 = vpow.pop %v1561
      %v1563 = vmul.f32 %v1538, 1.442695
      %v1564 = vpow.pop %v1563
      %v1565 = vmul.f32 %v1539, 1.442695
      %v1566 = vpow.pop %v1565
      %v1567 = vmul.f32 %v1540, 1.442695
      %v1568 = vpow.pop %v1567
      %v1569 = vmul.f32 %v1541, 1.442695
      %v1570 = vpow.pop %v1569
      %v1571 = vmul.f32 %v1542, 1.442695
      %v1572 = vpow.pop %v1571
      %v1573 = vmul.f32 %v1543, 1.442695
      %v1574 = vpow.pop %v1573
      %v1575 = vmul.f32 %v1544, 1.442695
      %v1576 = vpow.pop %v1575
      %v1577 = vsel %vm1480, %v1546, 0.0
      %1578 = vadd.xlane.f32.xlu0 %v1577
      %v1579 = vpop.xlane.xlu0 %1578
      %v1580 = vsel %vm1480, %v1548, 0.0
      %1581 = vadd.xlane.f32.xlu0 %v1580
      %v1582 = vpop.xlane.xlu0 %1581
      %v1583 = vsel %vm1480, %v1550, 0.0
      %1584 = vadd.xlane.f32.xlu0 %v1583
      %v1585 = vpop.xlane.xlu0 %1584
      %v1586 = vsel %vm1480, %v1552, 0.0
      %1587 = vadd.xlane.f32.xlu0 %v1586
      %v1588 = vpop.xlane.xlu0 %1587
      %v1589 = vsel %vm1480, %v1554, 0.0
      %1590 = vadd.xlane.f32.xlu0 %v1589
      %v1591 = vpop.xlane.xlu0 %1590
      %v1592 = vsel %vm1480, %v1556, 0.0
      %1593 = vadd.xlane.f32.xlu0 %v1592
      %v1594 = vpop.xlane.xlu0 %1593
      %v1595 = vsel %vm1480, %v1558, 0.0
      %1596 = vadd.xlane.f32.xlu0 %v1595
      %v1597 = vpop.xlane.xlu0 %1596
      %v1598 = vsel %vm1480, %v1560, 0.0
      %1599 = vadd.xlane.f32.xlu0 %v1598
      %v1600 = vpop.xlane.xlu0 %1599
      %v1601 = vsel %vm1480, %v1562, 0.0
      %1602 = vadd.xlane.f32.xlu0 %v1601
      %v1603 = vpop.xlane.xlu0 %1602
      %v1604 = vsel %vm1480, %v1564, 0.0
      %1605 = vadd.xlane.f32.xlu0 %v1604
      %v1606 = vpop.xlane.xlu0 %1605
      %v1607 = vsel %vm1480, %v1566, 0.0
      %1608 = vadd.xlane.f32.xlu0 %v1607
      %v1609 = vpop.xlane.xlu0 %1608
      %v1610 = vsel %vm1480, %v1568, 0.0
      %1611 = vadd.xlane.f32.xlu0 %v1610
      %v1612 = vpop.xlane.xlu0 %1611
      %v1613 = vsel %vm1480, %v1570, 0.0
      %1614 = vadd.xlane.f32.xlu0 %v1613
      %v1615 = vpop.xlane.xlu0 %1614
      %v1616 = vsel %vm1480, %v1572, 0.0
      %1617 = vadd.xlane.f32.xlu0 %v1616
      %v1618 = vpop.xlane.xlu0 %1617
      %v1619 = vsel %vm1480, %v1574, 0.0
      %1620 = vadd.xlane.f32.xlu0 %v1619
      %v1621 = vpop.xlane.xlu0 %1620
      %v1622 = vsel %vm1480, %v1576, 0.0
      %1623 = vadd.xlane.f32.xlu0 %v1622
      %v1624 = vpop.xlane.xlu0 %1623
      %v1625 = vlog2.pop %v1579
      %v1626 = vmul.f32 %v1625, 0.6931472
      %v1627 = vlog2.pop %v1582
      %v1628 = vmul.f32 %v1627, 0.6931472
      %v1629 = vlog2.pop %v1585
      %v1630 = vmul.f32 %v1629, 0.6931472
      %v1631 = vlog2.pop %v1588
      %v1632 = vmul.f32 %v1631, 0.6931472
      %v1633 = vlog2.pop %v1591
      %v1634 = vmul.f32 %v1633, 0.6931472
      %v1635 = vlog2.pop %v1594
      %v1636 = vmul.f32 %v1635, 0.6931472
      %v1637 = vlog2.pop %v1597
      %v1638 = vmul.f32 %v1637, 0.6931472
      %v1639 = vlog2.pop %v1600
      %v1640 = vmul.f32 %v1639, 0.6931472
      %v1641 = vlog2.pop %v1603
      %v1642 = vmul.f32 %v1641, 0.6931472
      %v1643 = vlog2.pop %v1606
      %v1644 = vmul.f32 %v1643, 0.6931472
      %v1645 = vlog2.pop %v1609
      %v1646 = vmul.f32 %v1645, 0.6931472
      %v1647 = vlog2.pop %v1612
      %v1648 = vmul.f32 %v1647, 0.6931472
      %v1649 = vlog2.pop %v1615
      %v1650 = vmul.f32 %v1649, 0.6931472
      %v1651 = vlog2.pop %v1618
      %v1652 = vmul.f32 %v1651, 0.6931472
      %v1653 = vlog2.pop %v1621
      %v1654 = vmul.f32 %v1653, 0.6931472
      %v1655 = vlog2.pop %v1624
      %v1656 = vmul.f32 %v1655, 0.6931472
      %v1657 = vsub.f32 %v1529, %v1626
      %v1658 = vsub.f32 %v1530, %v1628
      %v1659 = vsub.f32 %v1531, %v1630
      %v1660 = vsub.f32 %v1532, %v1632
      %v1661 = vsub.f32 %v1533, %v1634
      %v1662 = vsub.f32 %v1534, %v1636
      %v1663 = vsub.f32 %v1535, %v1638
      %v1664 = vsub.f32 %v1536, %v1640
      %v1665 = vsub.f32 %v1537, %v1642
      %v1666 = vsub.f32 %v1538, %v1644
      %v1667 = vsub.f32 %v1539, %v1646
      %v1668 = vsub.f32 %v1540, %v1648
      %v1669 = vsub.f32 %v1541, %v1650
      %v1670 = vsub.f32 %v1542, %v1652
      %v1671 = vsub.f32 %v1543, %v1654
      %v1672 = vsub.f32 %v1544, %v1656
      %1673 = vst.msk [vmem:[%s190] sm:$0xff] %vm1480, %v1657
      %1674 = vst.msk [vmem:[%s190 + $0x8] sm:$0xff] %vm1480, %v1658
      %1675 = vst.msk [vmem:[%s190 + $0x10] sm:$0xff] %vm1480, %v1659
      %1676 = vst.msk [vmem:[%s190 + $0x18] sm:$0xff] %vm1480, %v1660
      %1677 = vst.msk [vmem:[%s190 + $0x20] sm:$0xff] %vm1480, %v1661
      %1678 = vst.msk [vmem:[%s190 + $0x28] sm:$0xff] %vm1480, %v1662
      %1679 = vst.msk [vmem:[%s190 + $0x30] sm:$0xff] %vm1480, %v1663
      %1680 = vst.msk [vmem:[%s190 + $0x38] sm:$0xff] %vm1480, %v1664
      %1681 = vst.msk [vmem:[%s190 + $0x40] sm:$0xff] %vm1480, %v1665
      %1682 = vst.msk [vmem:[%s190 + $0x48] sm:$0xff] %vm1480, %v1666
      %1683 = vst.msk [vmem:[%s190 + $0x50] sm:$0xff] %vm1480, %v1667
      %1684 = vst.msk [vmem:[%s190 + $0x58] sm:$0xff] %vm1480, %v1668
      %1685 = vst.msk [vmem:[%s190 + $0x60] sm:$0xff] %vm1480, %v1669
      %1686 = vst.msk [vmem:[%s190 + $0x68] sm:$0xff] %vm1480, %v1670
      %1687 = vst.msk [vmem:[%s190 + $0x70] sm:$0xff] %vm1480, %v1671
      %1688 = vst.msk [vmem:[%s190 + $0x78] sm:$0xff] %vm1480, %v1672
      %p1689 = scmp.lt.s32.totalorder %s14, 1
      %s1690 = scalar_select %p1689, %s14, 1
      %s1691 = smul.addr %s1690, 16
      %s1692 = smul.addr %s1691, 8
      %s1693 = scalar_lea.vmem %s3, %s1692
      // Predicated region
      $region33: #{tpu_custom_call.1} parent=31 // pred_check
        %p1694 = pneg %p105
      $region34: #{tpu_custom_call.1} parent=31 // pred_check_branch
        %1696 = sbr.rel (%p1694) target = $region36
      $region35: #{tpu_custom_call.1} parent=31 // pred_region
        _
      $region36: #{tpu_custom_call.1} parent=31 // pred_fallthru
        _
    $region32: #{tpu_custom_call.1} parent=5 // pred_fallthru
      _
    %p1697 = scmp.le.s32.totalorder 2, %s9
    // Predicated region
    $region37: #{tpu_custom_call.1} parent=5 // pred_check
      %p1698 = pneg %p1697
    $region38: #{tpu_custom_call.1} parent=5 // pred_check_branch
      %1700 = sbr.rel (%p1698) target = $region40
    $region39: #{tpu_custom_call.1} parent=5 // pred_region
      %s1701 = ssub.s32 %s9, 2
      // Predicated region
      $region41: #{tpu_custom_call.1} parent=39 // pred_check
        %p1702 = pneg %p111
      $region42: #{tpu_custom_call.1} parent=39 // pred_check_branch
        %1704 = sbr.rel (%p1702) target = $region44
      $region43: #{tpu_custom_call.1} parent=39 // pred_region
        %p1705 = scmp.lt.s32.totalorder %s15, 1
        %s1706 = scalar_select %p1705, %s15, 1
        %s1707 = smul.addr %s1706, 16
        %s1708 = smul.addr %s1707, 8
        %s1709 = scalar_lea.vmem %s3, %s1708
      $region44: #{tpu_custom_call.1} parent=39 // pred_fallthru
        _
    $region40: #{tpu_custom_call.1} parent=5 // pred_fallthru
      _
  $region6: #{tpu_custom_call.1} parent=0 // loop_footer
    %s13 = sadd.s32 1, %s9
  $region7: #{tpu_custom_call.1} parent=0 // loop_footer_branch
    %8 = sbr.rel target = $region3
  $region8: #{tpu_custom_call.1} parent=0 // loop_exit
    _

</llo_original>
